<compile_context>
chip_gen: v7x
topology: tpu7x:2x2x1
jax: 0.10.0
libtpu: 0.0.40
codegen_flags: <defaults>
</compile_context>

<pallas_src>
import functools

import jax
import jax.numpy as jnp
from jax.experimental import pallas as pl
from jax.experimental.pallas import tpu as pltpu


def prepare_weights(wq, bq, wk, bk, wv, bv, wo, bo, compute_dtype=jnp.float32):
    """One-time weight prep (hoist out of the per-call path): pad d -> dp (multiple of 8),
    stack Q/K/V into one fused (3*dp, C) weight, pre-cast matmul operands to compute_dtype."""
    d, C = wq.shape
    dp = ((d + 7) // 8) * 8  # sublane-tile aligned projection width

    def pad_rows(w, b):
        wpad = jnp.zeros((dp, C), w.dtype).at[:d].set(w)
        bpad = jnp.zeros((dp, 1), b.dtype).at[:d].set(b)   # zero bias in pad rows -> exact
        return wpad, bpad

    wqp, bqp = pad_rows(wq, bq)
    wkp, bkp = pad_rows(wk, bk)
    wvp, bvp = pad_rows(wv, bv)

    w_qkv = jnp.concatenate([wqp, wkp, wvp], axis=0).astype(compute_dtype)  # (3*dp, C)
    b_qkv = jnp.concatenate([bqp, bkp, bvp], axis=0).astype(jnp.float32)    # (3*dp, 1)
    wo_p = jnp.zeros((C, dp), wo.dtype).at[:, :d].set(wo).astype(compute_dtype)  # (C, dp)
    bo_p = bo.astype(jnp.float32)                                            # (C, 1)
    return w_qkv, b_qkv, wo_p, bo_p, dp


def self_attention_kernel(x_ref, wqkv_ref, bqkv_ref, wo_ref, bo_ref, beta_ref,
                          out_ref, *, dp, compute_dtype):
    cd = compute_dtype
    beta = beta_ref[0]                       # scalar from SMEM
    w_qkv = wqkv_ref[...]                    # (3*dp, C), already compute_dtype
    b_qkv = bqkv_ref[...]                    # (3*dp, 1) f32
    wo = wo_ref[...]                         # (C, dp),  already compute_dtype
    bo = bo_ref[...]                         # (C, 1)   f32

    bg = x_ref.shape[0]                      # batches handled in this grid step
    L = x_ref.shape[2]
    ones_row = jnp.ones((1, L), cd)          # hoisted: MXU row-sum operand

    for b in range(bg):                      # static, tiny unroll (bg is B or 1)
        x = x_ref[b]                         # (C, L) f32

        # Fused 1x1-conv QKV projection: (3dp, C) @ (C, L) + (3dp, 1), f32 accumulate.
        qkv = jnp.dot(w_qkv, x.astype(cd),
                      preferred_element_type=jnp.float32) + b_qkv        # (3dp, L)

        # Tile-aligned (8-row) slices -> free views, no sublane relayout.
        q = qkv[0 * dp:1 * dp, :]            # (dp, L)
        k = qkv[1 * dp:2 * dp, :]            # (dp, L)
        v = qkv[2 * dp:3 * dp, :]            # (dp, L)

        # scores[i, j] = sum_d q[d, i] * k[d, j]; softmax scale == 1.0 because the
        # module sets self.k = C, so (C // self.k) ** 0.5 == 1.
        scores = jax.lax.dot_general(
            q.astype(cd), k.astype(cd),
            (((0,), (0,)), ((), ())),
            preferred_element_type=jnp.float32)                          # (L, L) f32

        m = jnp.max(scores, axis=-1, keepdims=True)
        e = jnp.exp(scores - m)                                          # (L, L) f32
        ec = e.astype(cd)

        # Deferred softmax normalization: both the unnormalized P@V and the row-sums
        # run on the (idle) MXU; the normalize multiply shrinks from L*L to dp*L elems.
        o_un = jax.lax.dot_general(
            v.astype(cd), ec,
            (((1,), (1,)), ((), ())),
            preferred_element_type=jnp.float32)                          # (dp, L)
        s = jax.lax.dot_general(
            ones_row, ec,
            (((1,), (1,)), ((), ())),
            preferred_element_type=jnp.float32)                          # (1, L)
        o = o_un * pl.reciprocal(s, approx=True)                         # (dp, L)

        # Output 1x1 conv: (C, dp) @ (dp, L) + (C, 1) -> (C, L).
        y = jnp.dot(wo, o.astype(cd), preferred_element_type=jnp.float32) + bo

        # max_pool1d(kernel_size=1) is identity; residual with learnable scalar beta.
        out_ref[b] = (beta * y + x).astype(out_ref.dtype)


def self_attention_prepared(x, w_qkv, b_qkv, wo_p, bo_p, beta, *, dp,
                            compute_dtype=jnp.float32, batch_grid=False,
                            donate_x=False):
    B, C, L = x.shape
    kernel = functools.partial(self_attention_kernel, dp=dp, compute_dtype=compute_dtype)

    # Folded (default): one grid step handles all B batches -> no per-step overhead on
    # the single-TC v5e/v6e.  batch_grid=True: one batch per grid step, "parallel"
    # semantics so v7x's two TensorCores split the batch.
    bg = 1 if batch_grid else B
    grid = (B // bg,)
    x_spec = pl.BlockSpec((bg, C, L), lambda i: (i, 0, 0))
    rep = lambda shape: pl.BlockSpec(shape, lambda i: (0,) * len(shape))

    return pl.pallas_call(
        kernel,
        out_shape=jax.ShapeDtypeStruct((B, C, L), x.dtype),
        grid_spec=pltpu.PrefetchScalarGridSpec(
            num_scalar_prefetch=0,
            grid=grid,
            in_specs=[
                x_spec,                                              # x -> (bg, C, L)
                rep(w_qkv.shape),                                    # fused Wqkv (3dp, C)
                rep(b_qkv.shape),                                    # fused bias (3dp, 1)
                rep(wo_p.shape),                                     # Wo (C, dp)
                rep(bo_p.shape),                                     # bo (C, 1)
                pl.BlockSpec(memory_space=pltpu.MemorySpace.SMEM),   # beta (scalar)
            ],
            out_specs=x_spec,
        ),
        compiler_params=pltpu.CompilerParams(
            dimension_semantics=("parallel",) if batch_grid else ("arbitrary",),
        ),
        input_output_aliases={0: 0} if donate_x else {},
    )(x, w_qkv, b_qkv, wo_p, bo_p, beta)


def self_attention(x, wq, bq, wk, bk, wv, bv, wo, bo, beta, *,
                   compute_dtype=jnp.float32, batch_grid=False, donate_x=False):
    w_qkv, b_qkv, wo_p, bo_p, dp = prepare_weights(
        wq, bq, wk, bk, wv, bv, wo, bo, compute_dtype)
    return self_attention_prepared(
        x, w_qkv, b_qkv, wo_p, bo_p, beta, dp=dp,
        compute_dtype=compute_dtype, batch_grid=batch_grid, donate_x=donate_x)


def reference(x, wq, bq, wk, bk, wv, bv, wo, bo, beta):
    # Pure-JAX reference of the PyTorch forward (for validation).
    q = jnp.einsum("dc,bcl->bdl", wq, x) + bq[None]     # (B, d, L)
    k = jnp.einsum("dc,bcl->bdl", wk, x) + bk[None]
    v = jnp.einsum("dc,bcl->bdl", wv, x) + bv[None]
    scores = jnp.einsum("bdq,bdk->bqk", q, k)           # (B, L, L); scale == 1.0
    attn = jax.nn.softmax(scores, axis=-1)
    o = jnp.einsum("bqk,bdk->bqd", attn, v)             # (B, L, d)
    o = jnp.einsum("cd,bqd->bcq", wo, o) + bo[None]     # (B, C, L)
    return beta[0] * o + x


if __name__ == "__main__":
    B, C, L = 2, 32, 128
    d = C // 8  # the module's Conv1d out_channels use the init arg k=8

    key = jax.random.PRNGKey(0)
    keys = jax.random.split(key, 10)

    x = jax.random.normal(keys[0], (B, C, L), dtype=jnp.float32)

    wq = 0.1 * jax.random.normal(keys[1], (d, C), dtype=jnp.float32)
    bq = 0.1 * jax.random.normal(keys[2], (d, 1), dtype=jnp.float32)
    wk = 0.1 * jax.random.normal(keys[3], (d, C), dtype=jnp.float32)
    bk = 0.1 * jax.random.normal(keys[4], (d, 1), dtype=jnp.float32)
    wv = 0.1 * jax.random.normal(keys[5], (d, C), dtype=jnp.float32)
    bv = 0.1 * jax.random.normal(keys[6], (d, 1), dtype=jnp.float32)
    wo = 0.1 * jax.random.normal(keys[7], (C, d), dtype=jnp.float32)
    bo = 0.1 * jax.random.normal(keys[8], (C, 1), dtype=jnp.float32)
    beta = jnp.ones((1,), dtype=jnp.float32)            # nn.Parameter(torch.ones(1))

    args = (x, wq, bq, wk, bk, wv, bv, wo, bo, beta)
    ref = reference(*args)

    # Weights prepared ONCE (hoisted), reused across calls / variants.
    w_qkv, b_qkv, wo_p, bo_p, dp = prepare_weights(wq, bq, wk, bk, wv, bv, wo, bo,
                                                   compute_dtype=jnp.float32)

    # Default path: f32 operands, single folded grid step (best for v5e/v6e single TC).
    out_f32 = jax.block_until_ready(
        self_attention_prepared(x, w_qkv, b_qkv, wo_p, bo_p, beta, dp=dp,
                                compute_dtype=jnp.float32, batch_grid=False))
    assert out_f32.shape == (B, C, L)
    assert jnp.allclose(out_f32, ref, atol=1e-2, rtol=1e-2), "f32 folded path mismatch"

    # v7x-style path: one batch per grid step, "parallel" over the two TensorCores.
    out_v7x = jax.block_until_ready(
        self_attention_prepared(x, w_qkv, b_qkv, wo_p, bo_p, beta, dp=dp,
                                compute_dtype=jnp.float32, batch_grid=True))
    assert jnp.allclose(out_v7x, ref, atol=1e-2, rtol=1e-2), "f32 batch-grid path mismatch"

    # bf16 matmul operands (f32 accumulation/softmax) -- kept for future large shapes.
    out_bf16 = jax.block_until_ready(self_attention(*args, compute_dtype=jnp.bfloat16))
    assert jnp.allclose(out_bf16, ref, atol=5e-2, rtol=5e-2), "bf16 path mismatch"

    print("KERNEL_OK")
</pallas_src>

<mosaic_0001>
module attributes {stable_mosaic.version = 11 : i64} {
  func.func @self_attention_kernel(%arg0: i32, %arg1: memref<2x32x128xf32, #tpu.memory_space<vmem>>, %arg2: memref<24x32xf32, #tpu.memory_space<vmem>>, %arg3: memref<24x1xf32, #tpu.memory_space<vmem>>, %arg4: memref<32x8xf32, #tpu.memory_space<vmem>>, %arg5: memref<32x1xf32, #tpu.memory_space<vmem>>, %arg6: memref<1xf32, #tpu.memory_space<smem>>, %arg7: memref<2x32x128xf32, #tpu.memory_space<vmem>>) attributes {dimension_semantics = [#tpu.dimension_semantics<arbitrary>], iteration_bounds = array<i64: 1>, scalar_prefetch = 0 : i64, scratch_operands = 0 : i64, tpu.core_type = #tpu.core_type<tc>, window_params = [{transform_indices = @transform_0, window_bounds = array<i64: 2, 32, 128>}, {pipeline_mode = #tpu.pipeline_mode<synchronous>, transform_indices = @transform_1, window_bounds = array<i64: 24, 32>}, {pipeline_mode = #tpu.pipeline_mode<synchronous>, transform_indices = @transform_2, window_bounds = array<i64: 24, 1>}, {pipeline_mode = #tpu.pipeline_mode<synchronous>, transform_indices = @transform_3, window_bounds = array<i64: 32, 8>}, {pipeline_mode = #tpu.pipeline_mode<synchronous>, transform_indices = @transform_4, window_bounds = array<i64: 32, 1>}, {transform_indices = @transform_5, window_bounds = array<i64: 1>}, {transform_indices = @transform_6, window_bounds = array<i64: 2, 32, 128>}]} {
    %c0 = arith.constant 0 : index
    %0 = memref.load %arg6[%c0] : memref<1xf32, #tpu.memory_space<smem>>
    %c0_0 = arith.constant 0 : index
    %c0_1 = arith.constant 0 : index
    %1 = vector.load %arg2[%c0_0, %c0_1] : memref<24x32xf32, #tpu.memory_space<vmem>>, vector<24x32xf32>
    %c0_2 = arith.constant 0 : index
    %c0_3 = arith.constant 0 : index
    %2 = vector.load %arg3[%c0_2, %c0_3] : memref<24x1xf32, #tpu.memory_space<vmem>>, vector<24x1xf32>
    %c0_4 = arith.constant 0 : index
    %c0_5 = arith.constant 0 : index
    %3 = vector.load %arg4[%c0_4, %c0_5] : memref<32x8xf32, #tpu.memory_space<vmem>>, vector<32x8xf32>
    %c0_6 = arith.constant 0 : index
    %c0_7 = arith.constant 0 : index
    %4 = vector.load %arg5[%c0_6, %c0_7] : memref<32x1xf32, #tpu.memory_space<vmem>>, vector<32x1xf32>
    %cst = arith.constant 1.000000e+00 : f32
    %5 = vector.broadcast %cst : f32 to vector<1x128xf32>
    %c0_8 = arith.constant 0 : index
    %c0_9 = arith.constant 0 : index
    %c0_10 = arith.constant 0 : index
    %6 = vector.load %arg1[%c0_8, %c0_9, %c0_10] : memref<2x32x128xf32, #tpu.memory_space<vmem>>, vector<1x32x128xf32>
    %7 = vector.shape_cast %6 : vector<1x32x128xf32> to vector<32x128xf32>
    %cst_11 = arith.constant dense<0.000000e+00> : vector<24x128xf32>
    %8 = tpu.matmul %1, %7, %cst_11 {dimension_numbers = #tpu.dot_dimension_numbers<[1], [0], [0], [1], [0, 0, 1, 1], [], []>} : vector<24x32xf32>, vector<32x128xf32>, vector<24x128xf32> -> vector<24x128xf32>
    %9 = vector.broadcast %2 : vector<24x1xf32> to vector<24x128xf32>
    %10 = arith.addf %8, %9 : vector<24x128xf32>
    %11 = vector.extract_strided_slice %10 {offsets = [0, 0], sizes = [8, 128], strides = [1, 1]} : vector<24x128xf32> to vector<8x128xf32>
    %12 = vector.extract_strided_slice %10 {offsets = [8, 0], sizes = [8, 128], strides = [1, 1]} : vector<24x128xf32> to vector<8x128xf32>
    %13 = vector.extract_strided_slice %10 {offsets = [16, 0], sizes = [8, 128], strides = [1, 1]} : vector<24x128xf32> to vector<8x128xf32>
    %cst_12 = arith.constant dense<0.000000e+00> : vector<128x128xf32>
    %14 = tpu.matmul %11, %12, %cst_12 {dimension_numbers = #tpu.dot_dimension_numbers<[0], [0], [1], [1], [0, 1, 1, 1], [], []>} : vector<8x128xf32>, vector<8x128xf32>, vector<128x128xf32> -> vector<128x128xf32>
    %cst_13 = arith.constant dense<0xFF800000> : vector<128xf32>
    %15 = vector.multi_reduction <maximumf>, %14, %cst_13 [1] : vector<128x128xf32> to vector<128xf32>
    %16 = vector.shape_cast %15 : vector<128xf32> to vector<128x1xf32>
    %17 = vector.broadcast %16 : vector<128x1xf32> to vector<128x128xf32>
    %18 = arith.subf %14, %17 : vector<128x128xf32>
    %19 = math.exp %18 : vector<128x128xf32>
    %cst_14 = arith.constant dense<0.000000e+00> : vector<8x128xf32>
    %20 = tpu.matmul %13, %19, %cst_14 {dimension_numbers = #tpu.dot_dimension_numbers<[1], [1], [0], [0], [0, 0, 1, 0], [], []>} : vector<8x128xf32>, vector<128x128xf32>, vector<8x128xf32> -> vector<8x128xf32>
    %cst_15 = arith.constant dense<0.000000e+00> : vector<1x128xf32>
    %21 = tpu.matmul %5, %19, %cst_15 {dimension_numbers = #tpu.dot_dimension_numbers<[1], [1], [0], [0], [0, 0, 1, 0], [], []>} : vector<1x128xf32>, vector<128x128xf32>, vector<1x128xf32> -> vector<1x128xf32>
    %22 = tpu.reciprocal %21 {approx = true} : vector<1x128xf32> -> vector<1x128xf32>
    %23 = vector.broadcast %22 : vector<1x128xf32> to vector<8x128xf32>
    %24 = arith.mulf %20, %23 : vector<8x128xf32>
    %cst_16 = arith.constant dense<0.000000e+00> : vector<32x128xf32>
    %25 = tpu.matmul %3, %24, %cst_16 {dimension_numbers = #tpu.dot_dimension_numbers<[1], [0], [0], [1], [0, 0, 1, 1], [], []>} : vector<32x8xf32>, vector<8x128xf32>, vector<32x128xf32> -> vector<32x128xf32>
    %26 = vector.broadcast %4 : vector<32x1xf32> to vector<32x128xf32>
    %27 = arith.addf %25, %26 : vector<32x128xf32>
    %28 = vector.broadcast %0 : f32 to vector<32x128xf32>
    %29 = arith.mulf %28, %27 : vector<32x128xf32>
    %30 = arith.addf %29, %7 : vector<32x128xf32>
    %c0_17 = arith.constant 0 : index
    %c0_18 = arith.constant 0 : index
    %c0_19 = arith.constant 0 : index
    %31 = vector.load %arg7[%c0_17, %c0_18, %c0_19] : memref<2x32x128xf32, #tpu.memory_space<vmem>>, vector<1x32x128xf32>
    %32 = vector.shape_cast %31 : vector<1x32x128xf32> to vector<32x128xf32>
    %33 = vector.shape_cast %30 : vector<32x128xf32> to vector<1x32x128xf32>
    tpu.vector_store %arg7[%c0_17, %c0_18, %c0_19], %33 {strides = array<i32>} : memref<2x32x128xf32, #tpu.memory_space<vmem>>, vector<1x32x128xf32>,
    %c1 = arith.constant 1 : index
    %c0_20 = arith.constant 0 : index
    %c0_21 = arith.constant 0 : index
    %34 = vector.load %arg1[%c1, %c0_20, %c0_21] : memref<2x32x128xf32, #tpu.memory_space<vmem>>, vector<1x32x128xf32>
    %35 = vector.shape_cast %34 : vector<1x32x128xf32> to vector<32x128xf32>
    %cst_22 = arith.constant dense<0.000000e+00> : vector<24x128xf32>
    %36 = tpu.matmul %1, %35, %cst_22 {dimension_numbers = #tpu.dot_dimension_numbers<[1], [0], [0], [1], [0, 0, 1, 1], [], []>} : vector<24x32xf32>, vector<32x128xf32>, vector<24x128xf32> -> vector<24x128xf32>
    %37 = vector.broadcast %2 : vector<24x1xf32> to vector<24x128xf32>
    %38 = arith.addf %36, %37 : vector<24x128xf32>
    %39 = vector.extract_strided_slice %38 {offsets = [0, 0], sizes = [8, 128], strides = [1, 1]} : vector<24x128xf32> to vector<8x128xf32>
    %40 = vector.extract_strided_slice %38 {offsets = [8, 0], sizes = [8, 128], strides = [1, 1]} : vector<24x128xf32> to vector<8x128xf32>
    %41 = vector.extract_strided_slice %38 {offsets = [16, 0], sizes = [8, 128], strides = [1, 1]} : vector<24x128xf32> to vector<8x128xf32>
    %cst_23 = arith.constant dense<0.000000e+00> : vector<128x128xf32>
    %42 = tpu.matmul %39, %40, %cst_23 {dimension_numbers = #tpu.dot_dimension_numbers<[0], [0], [1], [1], [0, 1, 1, 1], [], []>} : vector<8x128xf32>, vector<8x128xf32>, vector<128x128xf32> -> vector<128x128xf32>
    %cst_24 = arith.constant dense<0xFF800000> : vector<128xf32>
    %43 = vector.multi_reduction <maximumf>, %42, %cst_24 [1] : vector<128x128xf32> to vector<128xf32>
    %44 = vector.shape_cast %43 : vector<128xf32> to vector<128x1xf32>
    %45 = vector.broadcast %44 : vector<128x1xf32> to vector<128x128xf32>
    %46 = arith.subf %42, %45 : vector<128x128xf32>
    %47 = math.exp %46 : vector<128x128xf32>
    %cst_25 = arith.constant dense<0.000000e+00> : vector<8x128xf32>
    %48 = tpu.matmul %41, %47, %cst_25 {dimension_numbers = #tpu.dot_dimension_numbers<[1], [1], [0], [0], [0, 0, 1, 0], [], []>} : vector<8x128xf32>, vector<128x128xf32>, vector<8x128xf32> -> vector<8x128xf32>
    %cst_26 = arith.constant dense<0.000000e+00> : vector<1x128xf32>
    %49 = tpu.matmul %5, %47, %cst_26 {dimension_numbers = #tpu.dot_dimension_numbers<[1], [1], [0], [0], [0, 0, 1, 0], [], []>} : vector<1x128xf32>, vector<128x128xf32>, vector<1x128xf32> -> vector<1x128xf32>
    %50 = tpu.reciprocal %49 {approx = true} : vector<1x128xf32> -> vector<1x128xf32>
    %51 = vector.broadcast %50 : vector<1x128xf32> to vector<8x128xf32>
    %52 = arith.mulf %48, %51 : vector<8x128xf32>
    %cst_27 = arith.constant dense<0.000000e+00> : vector<32x128xf32>
    %53 = tpu.matmul %3, %52, %cst_27 {dimension_numbers = #tpu.dot_dimension_numbers<[1], [0], [0], [1], [0, 0, 1, 1], [], []>} : vector<32x8xf32>, vector<8x128xf32>, vector<32x128xf32> -> vector<32x128xf32>
    %54 = vector.broadcast %4 : vector<32x1xf32> to vector<32x128xf32>
    %55 = arith.addf %53, %54 : vector<32x128xf32>
    %56 = vector.broadcast %0 : f32 to vector<32x128xf32>
    %57 = arith.mulf %56, %55 : vector<32x128xf32>
    %58 = arith.addf %57, %35 : vector<32x128xf32>
    %c1_28 = arith.constant 1 : index
    %c0_29 = arith.constant 0 : index
    %c0_30 = arith.constant 0 : index
    %59 = vector.load %arg7[%c1_28, %c0_29, %c0_30] : memref<2x32x128xf32, #tpu.memory_space<vmem>>, vector<1x32x128xf32>
    %60 = vector.shape_cast %59 : vector<1x32x128xf32> to vector<32x128xf32>
    %61 = vector.shape_cast %58 : vector<32x128xf32> to vector<1x32x128xf32>
    tpu.vector_store %arg7[%c1_28, %c0_29, %c0_30], %61 {strides = array<i32>} : memref<2x32x128xf32, #tpu.memory_space<vmem>>, vector<1x32x128xf32>,
    return
  }
  func.func @transform_0(%arg0: i32) -> (i32, i32, i32) {
    %c0_i32 = arith.constant 0 : i32
    %c0_i32_0 = arith.constant 0 : i32
    %c0_i32_1 = arith.constant 0 : i32
    return %arg0, %c0_i32, %c0_i32_0 : i32, i32, i32
  }
  func.func @transform_1(%arg0: i32) -> (i32, i32) {
    %c0_i32 = arith.constant 0 : i32
    %c0_i32_0 = arith.constant 0 : i32
    %c0_i32_1 = arith.constant 0 : i32
    return %c0_i32, %c0_i32_0 : i32, i32
  }
  func.func @transform_2(%arg0: i32) -> (i32, i32) {
    %c0_i32 = arith.constant 0 : i32
    %c0_i32_0 = arith.constant 0 : i32
    %c0_i32_1 = arith.constant 0 : i32
    return %c0_i32, %c0_i32_0 : i32, i32
  }
  func.func @transform_3(%arg0: i32) -> (i32, i32) {
    %c0_i32 = arith.constant 0 : i32
    %c0_i32_0 = arith.constant 0 : i32
    %c0_i32_1 = arith.constant 0 : i32
    return %c0_i32, %c0_i32_0 : i32, i32
  }
  func.func @transform_4(%arg0: i32) -> (i32, i32) {
    %c0_i32 = arith.constant 0 : i32
    %c0_i32_0 = arith.constant 0 : i32
    %c0_i32_1 = arith.constant 0 : i32
    return %c0_i32, %c0_i32_0 : i32, i32
  }
  func.func @transform_5(%arg0: i32) -> i32 {
    %c0_i32 = arith.constant 0 : i32
    %c0_i32_0 = arith.constant 0 : i32
    return %c0_i32 : i32
  }
  func.func @transform_6(%arg0: i32) -> (i32, i32, i32) {
    %c0_i32 = arith.constant 0 : i32
    %c0_i32_0 = arith.constant 0 : i32
    %c0_i32_1 = arith.constant 0 : i32
    return %arg0, %c0_i32, %c0_i32_0 : i32, i32, i32
  }
}

</mosaic_0001>

<llo_original>
// kernel: tpu_custom_call.1
$region0: #{tpu_custom_call.1}
  #allocation0 [shape = 'u32[]', space=smem, size = 0x4, offset = 0x4, fixed_abs, tag = 'smem constant byte address 0x4 - core index']
  #allocation1 [shape = 'u32[144,128]{1,0:T(1,128)}', space=vmem, size = 0x12000, scoped, tag = 'internal scratch']
  #allocation2 [shape = 'f32[1]{0:T(128)S(6)}', space=smem, size = 0x200, scoped, tag = 'scoped memory for tpu_custom_call.1']
  %s0 = inlined_call_operand.vmem [shape: f32[2,32,128], index: 0, kind: input, shape index: {}]
  %s1 = inlined_call_operand.vmem [shape: f32[24,32], index: 1, kind: input, shape index: {}]
  %s2 = inlined_call_operand.vmem [shape: f32[24,1], index: 2, kind: input, shape index: {}]
  %s3 = inlined_call_operand.vmem [shape: f32[32,8], index: 3, kind: input, shape index: {}]
  %s4 = inlined_call_operand.vmem [shape: f32[32,1], index: 4, kind: input, shape index: {}]
  %s5 = inlined_call_operand.<no memory space> [shape: f32[1], index: 5, kind: input, shape index: {}]
  %s6 = inlined_call_operand.hbm [shape: f32[2,32,128], index: 6, kind: output, shape index: {}]
  %s7 = sld [smem:[#allocation0]]
  $region34: #{tpu_custom_call.1} parent=0
    _
  %s9 = ssub.s32 1, %s7
  %s10 = scalar_select 0, %s9, %s7
  %11 = sst [smem:[#allocation2]] %s5
  $region1: #{tpu_custom_call.1} parent=0
    #allocation3 [shape = 'u8[32768]{0}', space=vmem, size = 0x8000, scoped, tag = 'output window, operand 0, single buffered']
    #allocation4 [shape = 's32[1]{0}', space=sflag, size = 0x4, scoped, tag = 'scoped memory for tpu_custom_call.1']
    %12 = vsyncpa [#allocation4], 0
    // Predicated region
    $region2: #{tpu_custom_call.1} parent=1 // pred_check
      _
    $region3: #{tpu_custom_call.1} parent=1 // pred_check_branch
      %14 = sbr.rel (0) target = $region5
    $region4: #{tpu_custom_call.1} parent=1 // pred_region
      _
    $region5: #{tpu_custom_call.1} parent=1 // pred_fallthru
      _
    // Predicated region
    $region6: #{tpu_custom_call.1} parent=1 // pred_check
      _
    $region7: #{tpu_custom_call.1} parent=1 // pred_check_branch
      %16 = sbr.rel (0) target = $region9
    $region8: #{tpu_custom_call.1} parent=1 // pred_region
      _
    $region9: #{tpu_custom_call.1} parent=1 // pred_fallthru
      _
    // Predicated region
    $region10: #{tpu_custom_call.1} parent=1 // pred_check
      _
    $region11: #{tpu_custom_call.1} parent=1 // pred_check_branch
      %18 = sbr.rel (0) target = $region13
    $region12: #{tpu_custom_call.1} parent=1 // pred_region
      _
    $region13: #{tpu_custom_call.1} parent=1 // pred_fallthru
      _
    // Predicated region
    $region14: #{tpu_custom_call.1} parent=1 // pred_check
      _
    $region15: #{tpu_custom_call.1} parent=1 // pred_check_branch
      %20 = sbr.rel (0) target = $region17
    $region16: #{tpu_custom_call.1} parent=1 // pred_region
      _
    $region17: #{tpu_custom_call.1} parent=1 // pred_fallthru
      _
    // Predicated region
    $region18: #{tpu_custom_call.1} parent=1 // pred_check
      _
    $region19: #{tpu_custom_call.1} parent=1 // pred_check_branch
      %22 = sbr.rel (0) target = $region21
    $region20: #{tpu_custom_call.1} parent=1 // pred_region
      _
    $region21: #{tpu_custom_call.1} parent=1 // pred_fallthru
      _
    // Predicated region
    $region22: #{tpu_custom_call.1} parent=1 // pred_check
      _
    $region23: #{tpu_custom_call.1} parent=1 // pred_check_branch
      %24 = sbr.rel (0) target = $region25
    $region24: #{tpu_custom_call.1} parent=1 // pred_region
      _
    $region25: #{tpu_custom_call.1} parent=1 // pred_fallthru
      _
    %s25 = sld [smem:[#allocation2]]
    %v26 = vld [vmem:[%s1] sm:$0xff]
    %v27 = vld [vmem:[%s1 + $0x8] sm:$0xff]
    %v28 = vld [vmem:[%s1 + $0x10] sm:$0xff]
    %v29 = vld [vmem:[%s2] sm:$0xff]
    %v30 = vld [vmem:[%s2 + $0x8] sm:$0xff]
    %v31 = vld [vmem:[%s2 + $0x10] sm:$0xff]
    %v32 = vld [vmem:[%s3] sm:$0xff]
    %v33 = vld [vmem:[%s3 + $0x8] sm:$0xff]
    %v34 = vld [vmem:[%s3 + $0x10] sm:$0xff]
    %v35 = vld [vmem:[%s3 + $0x18] sm:$0xff]
    %v36 = vld [vmem:[%s4] sm:$0xff]
    %v37 = vld [vmem:[%s4 + $0x8] sm:$0xff]
    %v38 = vld [vmem:[%s4 + $0x10] sm:$0xff]
    %v39 = vld [vmem:[%s4 + $0x18] sm:$0xff]
    %v40 = vld [vmem:[%s0] sm:$0xff]
    %v41 = vld [vmem:[%s0 + $0x8] sm:$0xff]
    %v42 = vld [vmem:[%s0 + $0x10] sm:$0xff]
    %v43 = vld [vmem:[%s0 + $0x18] sm:$0xff]
    %45 = vset.pattern.permute.xlu0 0
    %46 = vperm.xlu0 %45, %v29
    %v47 = vpop.permute.xlu0 %46
    %50 = vset.pattern.permute.xlu0 0
    %51 = vperm.xlu0 %50, %v30
    %v52 = vpop.permute.xlu0 %51
    %55 = vset.pattern.permute.xlu0 0
    %56 = vperm.xlu0 %55, %v31
    %v57 = vpop.permute.xlu0 %56
    %vm59 = vcmask 261120
    %v61 = vsel %vm59, %v26, 0
    %v64 = vsel %vm59, %v27, 0
    %v67 = vsel %vm59, %v28, 0
    %69 = vmatprep.subr.mxu0 0.0
    %70 = vmatpush1.msra.mxu0 %v40
    %71 = vmatprep.subr.mxu0 0.0
    %72 = vmatpush1.msra.mxu0 %v41
    %73 = vmatprep.subr.mxu0 0.0
    %74 = vmatpush1.msra.mxu0 %v42
    %75 = vmatprep.subr.mxu0 0.0
    %76 = vmatpush1.msra.mxu0 %v43
    %77 = vmatprep.subr.mxu0 0.0
    %78 = vmatpush1.msra.mxu0 0.0
    %79 = vmatprep.subr.mxu0 0.0
    %80 = vmatpush1.msra.mxu0 0.0
    %81 = vmatprep.subr.mxu0 0.0
    %82 = vmatpush1.msra.mxu0 0.0
    %83 = vmatprep.subr.mxu0 0.0
    %84 = vmatpush1.msra.mxu0 0.0
    %85 = vmatprep.subr.mxu0 0.0
    %86 = vmatpush1.msra.mxu0 0.0
    %87 = vmatprep.subr.mxu0 0.0
    %88 = vmatpush1.msra.mxu0 0.0
    %89 = vmatprep.subr.mxu0 0.0
    %90 = vmatpush1.msra.mxu0 0.0
    %91 = vmatprep.subr.mxu0 0.0
    %92 = vmatpush1.msra.mxu0 0.0
    %93 = vmatprep.subr.mxu0 0.0
    %94 = vmatpush1.msra.mxu0 0.0
    %95 = vmatprep.subr.mxu0 0.0
    %96 = vmatpush1.msra.mxu0 0.0
    %97 = vmatprep.subr.mxu0 0.0
    %98 = vmatpush1.msra.mxu0 0.0
    %99 = vmatprep.subr.mxu0 0.0
    %100 = vmatpush1.msra.mxu0 0.0
    %101 = vmatprep.subr.mxu0 0.0
    %102 = vmatpush1.msra.mxu0 0.0
    %103 = vmatprep.subr.mxu0 0.0
    %104 = vmatpush1.msra.mxu0 0.0
    %105 = vmatprep.subr.mxu0 0.0
    %106 = vmatpush1.msra.mxu0 0.0
    %107 = vmatprep.subr.mxu0 0.0
    %108 = vmatpush1.msra.mxu0 0.0
    %109 = vmatprep.subr.mxu0 0.0
    %110 = vmatpush1.msra.mxu0 0.0
    %111 = vmatprep.subr.mxu0 0.0
    %112 = vmatpush1.msra.mxu0 0.0
    %113 = vmatprep.subr.mxu0 0.0
    %114 = vmatpush1.msra.mxu0 0.0
    %115 = vmatprep.subr.mxu0 0.0
    %116 = vmatpush1.msra.mxu0 0.0
    %117 = vmatprep.subr.mxu0 0.0
    %118 = vmatpush1.msra.mxu0 0.0
    %119 = vmatprep.subr.mxu0 0.0
    %120 = vmatpush1.msra.mxu0 0.0
    %121 = vmatprep.subr.mxu0 0.0
    %122 = vmatpush1.msra.mxu0 0.0
    %123 = vmatprep.subr.mxu0 0.0
    %124 = vmatpush1.msra.mxu0 0.0
    %125 = vmatprep.subr.mxu0 0.0
    %126 = vmatpush1.msra.mxu0 0.0
    %127 = vmatprep.subr.mxu0 0.0
    %128 = vmatpush1.msra.mxu0 0.0
    %129 = vmatprep.subr.mxu0 0.0
    %130 = vmatpush1.msra.mxu0 0.0
    %131 = vmatprep.subr.mxu0 0.0
    %132 = vmatpush1.msra.mxu0 0.0
    %133 = vmatprep.mubr.f32.mxu0 0.0
    %134 = vmatmul.mubr.f32.gmra.mrb[0].mxu0 %v61
    %v135 = vpop.f32.mrb[0].mxu0
    %v136 = vadd.f32 %v47, %v135
    %v137 = vpop.f32.mrb[0].mxu0
    %138 = vmatprep.mubr.f32.mxu0 0.0
    %139 = vmatmul.mubr.f32.gmra.mrb[0].mxu0 %v64
    %v140 = vpop.f32.mrb[0].mxu0
    %v141 = vadd.f32 %v52, %v140
    %v142 = vpop.f32.mrb[0].mxu0
    %143 = vmatprep.mubr.f32.mxu0 0.0
    %144 = vmatmul.mubr.f32.gmra.mrb[0].mxu0 %v67
    %v145 = vpop.f32.mrb[0].mxu0
    %v146 = vadd.f32 %v57, %v145
    %v147 = vpop.f32.mrb[0].mxu0
    %148 = vdwg.mxu0
    %149 = vxpose.xlu0.b32.start [1/16] %v136, 128
    %150 = vxpose.xlu0.b32.cont [2/16] 0.0, 128
    %151 = vxpose.xlu0.b32.cont [3/16] 0.0, 128
    %152 = vxpose.xlu0.b32.cont [4/16] 0.0, 128
    %153 = vxpose.xlu0.b32.cont [5/16] 0.0, 128
    %154 = vxpose.xlu0.b32.cont [6/16] 0.0, 128
    %155 = vxpose.xlu0.b32.cont [7/16] 0.0, 128
    %156 = vxpose.xlu0.b32.cont [8/16] 0.0, 128
    %157 = vxpose.xlu0.b32.cont [9/16] 0.0, 128
    %158 = vxpose.xlu0.b32.cont [10/16] 0.0, 128
    %159 = vxpose.xlu0.b32.cont [11/16] 0.0, 128
    %160 = vxpose.xlu0.b32.cont [12/16] 0.0, 128
    %161 = vxpose.xlu0.b32.cont [13/16] 0.0, 128
    %162 = vxpose.xlu0.b32.cont [14/16] 0.0, 128
    %163 = vxpose.xlu0.b32.cont [15/16] 0.0, 128
    %164 = vxpose.xlu0.b32.end [16/16] 0.0, 128
    %v165 = vpop.trf.xlu0
    %v166 = vpop.trf.xlu0
    %v167 = vpop.trf.xlu0
    %v168 = vpop.trf.xlu0
    %v169 = vpop.trf.xlu0
    %v170 = vpop.trf.xlu0
    %v171 = vpop.trf.xlu0
    %v172 = vpop.trf.xlu0
    %v173 = vpop.trf.xlu0
    %v174 = vpop.trf.xlu0
    %v175 = vpop.trf.xlu0
    %v176 = vpop.trf.xlu0
    %v177 = vpop.trf.xlu0
    %v178 = vpop.trf.xlu0
    %v179 = vpop.trf.xlu0
    %v180 = vpop.trf.xlu0
    %vm181 = vcmask 64512
    %v183 = vsel %vm181, %v165, 0
    %v186 = vsel %vm181, %v166, 0
    %v189 = vsel %vm181, %v167, 0
    %v192 = vsel %vm181, %v168, 0
    %v195 = vsel %vm181, %v169, 0
    %v198 = vsel %vm181, %v170, 0
    %v201 = vsel %vm181, %v171, 0
    %v204 = vsel %vm181, %v172, 0
    %v207 = vsel %vm181, %v173, 0
    %v210 = vsel %vm181, %v174, 0
    %v213 = vsel %vm181, %v175, 0
    %v216 = vsel %vm181, %v176, 0
    %v219 = vsel %vm181, %v177, 0
    %v222 = vsel %vm181, %v178, 0
    %v225 = vsel %vm181, %v179, 0
    %v228 = vsel %vm181, %v180, 0
    %230 = vmatprep.subr.mxu0 0.0
    %231 = vmatpush1.msra.mxu0 %v141
    %232 = vmatprep.subr.mxu0 0.0
    %233 = vmatpush1.msra.mxu0 0.0
    %234 = vmatprep.subr.mxu0 0.0
    %235 = vmatpush1.msra.mxu0 0.0
    %236 = vmatprep.subr.mxu0 0.0
    %237 = vmatpush1.msra.mxu0 0.0
    %238 = vmatprep.subr.mxu0 0.0
    %239 = vmatpush1.msra.mxu0 0.0
    %240 = vmatprep.subr.mxu0 0.0
    %241 = vmatpush1.msra.mxu0 0.0
    %242 = vmatprep.subr.mxu0 0.0
    %243 = vmatpush1.msra.mxu0 0.0
    %244 = vmatprep.subr.mxu0 0.0
    %245 = vmatpush1.msra.mxu0 0.0
    %246 = vmatprep.subr.mxu0 0.0
    %247 = vmatpush1.msra.mxu0 0.0
    %248 = vmatprep.subr.mxu0 0.0
    %249 = vmatpush1.msra.mxu0 0.0
    %250 = vmatprep.subr.mxu0 0.0
    %251 = vmatpush1.msra.mxu0 0.0
    %252 = vmatprep.subr.mxu0 0.0
    %253 = vmatpush1.msra.mxu0 0.0
    %254 = vmatprep.subr.mxu0 0.0
    %255 = vmatpush1.msra.mxu0 0.0
    %256 = vmatprep.subr.mxu0 0.0
    %257 = vmatpush1.msra.mxu0 0.0
    %258 = vmatprep.subr.mxu0 0.0
    %259 = vmatpush1.msra.mxu0 0.0
    %260 = vmatprep.subr.mxu0 0.0
    %261 = vmatpush1.msra.mxu0 0.0
    %262 = vmatprep.subr.mxu0 0.0
    %263 = vmatpush1.msra.mxu0 0.0
    %264 = vmatprep.subr.mxu0 0.0
    %265 = vmatpush1.msra.mxu0 0.0
    %266 = vmatprep.subr.mxu0 0.0
    %267 = vmatpush1.msra.mxu0 0.0
    %268 = vmatprep.subr.mxu0 0.0
    %269 = vmatpush1.msra.mxu0 0.0
    %270 = vmatprep.subr.mxu0 0.0
    %271 = vmatpush1.msra.mxu0 0.0
    %272 = vmatprep.subr.mxu0 0.0
    %273 = vmatpush1.msra.mxu0 0.0
    %274 = vmatprep.subr.mxu0 0.0
    %275 = vmatpush1.msra.mxu0 0.0
    %276 = vmatprep.subr.mxu0 0.0
    %277 = vmatpush1.msra.mxu0 0.0
    %278 = vmatprep.subr.mxu0 0.0
    %279 = vmatpush1.msra.mxu0 0.0
    %280 = vmatprep.subr.mxu0 0.0
    %281 = vmatpush1.msra.mxu0 0.0
    %282 = vmatprep.subr.mxu0 0.0
    %283 = vmatpush1.msra.mxu0 0.0
    %284 = vmatprep.subr.mxu0 0.0
    %285 = vmatpush1.msra.mxu0 0.0
    %286 = vmatprep.subr.mxu0 0.0
    %287 = vmatpush1.msra.mxu0 0.0
    %288 = vmatprep.subr.mxu0 0.0
    %289 = vmatpush1.msra.mxu0 0.0
    %290 = vmatprep.subr.mxu0 0.0
    %291 = vmatpush1.msra.mxu0 0.0
    %292 = vmatprep.subr.mxu0 0.0
    %293 = vmatpush1.msra.mxu0 0.0
    %294 = vmatprep.mubr.f32.mxu0 0.0
    %295 = vmatmul.mubr.f32.gmra.mrb[0].mxu0 %v183
    %v296 = vpop.f32.mrb[0].mxu0
    %v297 = vadd.f32 0.0, %v296
    %v298 = vpop.f32.mrb[0].mxu0
    %299 = vmatprep.mubr.f32.mxu0 0.0
    %300 = vmatmul.mubr.f32.gmra.mrb[0].mxu0 %v186
    %v301 = vpop.f32.mrb[0].mxu0
    %v302 = vadd.f32 0.0, %v301
    %v303 = vpop.f32.mrb[0].mxu0
    %304 = vmatprep.mubr.f32.mxu0 0.0
    %305 = vmatmul.mubr.f32.gmra.mrb[0].mxu0 %v189
    %v306 = vpop.f32.mrb[0].mxu0
    %v307 = vadd.f32 0.0, %v306
    %v308 = vpop.f32.mrb[0].mxu0
    %309 = vmatprep.mubr.f32.mxu0 0.0
    %310 = vmatmul.mubr.f32.gmra.mrb[0].mxu0 %v192
    %v311 = vpop.f32.mrb[0].mxu0
    %v312 = vadd.f32 0.0, %v311
    %v313 = vpop.f32.mrb[0].mxu0
    %314 = vmatprep.mubr.f32.mxu0 0.0
    %315 = vmatmul.mubr.f32.gmra.mrb[0].mxu0 %v195
    %v316 = vpop.f32.mrb[0].mxu0
    %v317 = vadd.f32 0.0, %v316
    %v318 = vpop.f32.mrb[0].mxu0
    %319 = vmatprep.mubr.f32.mxu0 0.0
    %320 = vmatmul.mubr.f32.gmra.mrb[0].mxu0 %v198
    %v321 = vpop.f32.mrb[0].mxu0
    %v322 = vadd.f32 0.0, %v321
    %v323 = vpop.f32.mrb[0].mxu0
    %324 = vmatprep.mubr.f32.mxu0 0.0
    %325 = vmatmul.mubr.f32.gmra.mrb[0].mxu0 %v201
    %v326 = vpop.f32.mrb[0].mxu0
    %v327 = vadd.f32 0.0, %v326
    %v328 = vpop.f32.mrb[0].mxu0
    %329 = vmatprep.mubr.f32.mxu0 0.0
    %330 = vmatmul.mubr.f32.gmra.mrb[0].mxu0 %v204
    %v331 = vpop.f32.mrb[0].mxu0
    %v332 = vadd.f32 0.0, %v331
    %v333 = vpop.f32.mrb[0].mxu0
    %334 = vmatprep.mubr.f32.mxu0 0.0
    %335 = vmatmul.mubr.f32.gmra.mrb[0].mxu0 %v207
    %v336 = vpop.f32.mrb[0].mxu0
    %v337 = vadd.f32 0.0, %v336
    %v338 = vpop.f32.mrb[0].mxu0
    %339 = vmatprep.mubr.f32.mxu0 0.0
    %340 = vmatmul.mubr.f32.gmra.mrb[0].mxu0 %v210
    %v341 = vpop.f32.mrb[0].mxu0
    %v342 = vadd.f32 0.0, %v341
    %v343 = vpop.f32.mrb[0].mxu0
    %344 = vmatprep.mubr.f32.mxu0 0.0
    %345 = vmatmul.mubr.f32.gmra.mrb[0].mxu0 %v213
    %v346 = vpop.f32.mrb[0].mxu0
    %v347 = vadd.f32 0.0, %v346
    %v348 = vpop.f32.mrb[0].mxu0
    %349 = vmatprep.mubr.f32.mxu0 0.0
    %350 = vmatmul.mubr.f32.gmra.mrb[0].mxu0 %v216
    %v351 = vpop.f32.mrb[0].mxu0
    %v352 = vadd.f32 0.0, %v351
    %v353 = vpop.f32.mrb[0].mxu0
    %354 = vmatprep.mubr.f32.mxu0 0.0
    %355 = vmatmul.mubr.f32.gmra.mrb[0].mxu0 %v219
    %v356 = vpop.f32.mrb[0].mxu0
    %v357 = vadd.f32 0.0, %v356
    %v358 = vpop.f32.mrb[0].mxu0
    %359 = vmatprep.mubr.f32.mxu0 0.0
    %360 = vmatmul.mubr.f32.gmra.mrb[0].mxu0 %v222
    %v361 = vpop.f32.mrb[0].mxu0
    %v362 = vadd.f32 0.0, %v361
    %v363 = vpop.f32.mrb[0].mxu0
    %364 = vmatprep.mubr.f32.mxu0 0.0
    %365 = vmatmul.mubr.f32.gmra.mrb[0].mxu0 %v225
    %v366 = vpop.f32.mrb[0].mxu0
    %v367 = vadd.f32 0.0, %v366
    %v368 = vpop.f32.mrb[0].mxu0
    %369 = vmatprep.mubr.f32.mxu0 0.0
    %370 = vmatmul.mubr.f32.gmra.mrb[0].mxu0 %v228
    %v371 = vpop.f32.mrb[0].mxu0
    %v372 = vadd.f32 0.0, %v371
    %v373 = vpop.f32.mrb[0].mxu0
    %374 = vdwg.mxu0
    %375 = vmax.xlane.f32.xlu0 %v297
    %v376 = vpop.xlane.xlu0 %375
    %377 = vmax.xlane.f32.xlu0 %v302
    %v378 = vpop.xlane.xlu0 %377
    %379 = vmax.xlane.f32.xlu0 %v307
    %v380 = vpop.xlane.xlu0 %379
    %381 = vmax.xlane.f32.xlu0 %v312
    %v382 = vpop.xlane.xlu0 %381
    %383 = vmax.xlane.f32.xlu0 %v317
    %v384 = vpop.xlane.xlu0 %383
    %385 = vmax.xlane.f32.xlu0 %v322
    %v386 = vpop.xlane.xlu0 %385
    %387 = vmax.xlane.f32.xlu0 %v327
    %v388 = vpop.xlane.xlu0 %387
    %389 = vmax.xlane.f32.xlu0 %v332
    %v390 = vpop.xlane.xlu0 %389
    %391 = vmax.xlane.f32.xlu0 %v337
    %v392 = vpop.xlane.xlu0 %391
    %393 = vmax.xlane.f32.xlu0 %v342
    %v394 = vpop.xlane.xlu0 %393
    %395 = vmax.xlane.f32.xlu0 %v347
    %v396 = vpop.xlane.xlu0 %395
    %397 = vmax.xlane.f32.xlu0 %v352
    %v398 = vpop.xlane.xlu0 %397
    %399 = vmax.xlane.f32.xlu0 %v357
    %v400 = vpop.xlane.xlu0 %399
    %401 = vmax.xlane.f32.xlu0 %v362
    %v402 = vpop.xlane.xlu0 %401
    %403 = vmax.xlane.f32.xlu0 %v367
    %v404 = vpop.xlane.xlu0 %403
    %405 = vmax.xlane.f32.xlu0 %v372
    %v406 = vpop.xlane.xlu0 %405
    %v407 = vsub.f32 %v297, %v376
    %v408 = vsub.f32 %v302, %v378
    %v409 = vsub.f32 %v307, %v380
    %v410 = vsub.f32 %v312, %v382
    %v411 = vsub.f32 %v317, %v384
    %v412 = vsub.f32 %v322, %v386
    %v413 = vsub.f32 %v327, %v388
    %v414 = vsub.f32 %v332, %v390
    %v415 = vsub.f32 %v337, %v392
    %v416 = vsub.f32 %v342, %v394
    %v417 = vsub.f32 %v347, %v396
    %v418 = vsub.f32 %v352, %v398
    %v419 = vsub.f32 %v357, %v400
    %v420 = vsub.f32 %v362, %v402
    %v421 = vsub.f32 %v367, %v404
    %v422 = vsub.f32 %v372, %v406
    %v423 = vmul.f32 %v407, 1.442695
    %v424 = vpow.pop %v423
    %v425 = vmul.f32 %v408, 1.442695
    %v426 = vpow.pop %v425
    %v427 = vmul.f32 %v409, 1.442695
    %v428 = vpow.pop %v427
    %v429 = vmul.f32 %v410, 1.442695
    %v430 = vpow.pop %v429
    %v431 = vmul.f32 %v411, 1.442695
    %v432 = vpow.pop %v431
    %v433 = vmul.f32 %v412, 1.442695
    %v434 = vpow.pop %v433
    %v435 = vmul.f32 %v413, 1.442695
    %v436 = vpow.pop %v435
    %v437 = vmul.f32 %v414, 1.442695
    %v438 = vpow.pop %v437
    %v439 = vmul.f32 %v415, 1.442695
    %v440 = vpow.pop %v439
    %v441 = vmul.f32 %v416, 1.442695
    %v442 = vpow.pop %v441
    %v443 = vmul.f32 %v417, 1.442695
    %v444 = vpow.pop %v443
    %v445 = vmul.f32 %v418, 1.442695
    %v446 = vpow.pop %v445
    %v447 = vmul.f32 %v419, 1.442695
    %v448 = vpow.pop %v447
    %v449 = vmul.f32 %v420, 1.442695
    %v450 = vpow.pop %v449
    %v451 = vmul.f32 %v421, 1.442695
    %v452 = vpow.pop %v451
    %v453 = vmul.f32 %v422, 1.442695
    %v454 = vpow.pop %v453
    %455 = vmatprep.subr.mxu0 0.0
    %456 = vmatpush1.xpose.msra.mxu0 %v424
    %457 = vmatprep.subr.mxu0 0.0
    %458 = vmatpush1.xpose.msra.mxu0 %v426
    %459 = vmatprep.subr.mxu0 0.0
    %460 = vmatpush1.xpose.msra.mxu0 %v428
    %461 = vmatprep.subr.mxu0 0.0
    %462 = vmatpush1.xpose.msra.mxu0 %v430
    %463 = vmatprep.subr.mxu0 0.0
    %464 = vmatpush1.xpose.msra.mxu0 %v432
    %465 = vmatprep.subr.mxu0 0.0
    %466 = vmatpush1.xpose.msra.mxu0 %v434
    %467 = vmatprep.subr.mxu0 0.0
    %468 = vmatpush1.xpose.msra.mxu0 %v436
    %469 = vmatprep.subr.mxu0 0.0
    %470 = vmatpush1.xpose.msra.mxu0 %v438
    %471 = vmatprep.subr.mxu0 0.0
    %472 = vmatpush1.xpose.msra.mxu0 %v440
    %473 = vmatprep.subr.mxu0 0.0
    %474 = vmatpush1.xpose.msra.mxu0 %v442
    %475 = vmatprep.subr.mxu0 0.0
    %476 = vmatpush1.xpose.msra.mxu0 %v444
    %477 = vmatprep.subr.mxu0 0.0
    %478 = vmatpush1.xpose.msra.mxu0 %v446
    %479 = vmatprep.subr.mxu0 0.0
    %480 = vmatpush1.xpose.msra.mxu0 %v448
    %481 = vmatprep.subr.mxu0 0.0
    %482 = vmatpush1.xpose.msra.mxu0 %v450
    %483 = vmatprep.subr.mxu0 0.0
    %484 = vmatpush1.xpose.msra.mxu0 %v452
    %485 = vmatprep.subr.mxu0 0.0
    %486 = vmatpush1.xpose.msra.mxu0 %v454
    %487 = vmatprep.subr.mxu0 0.0
    %488 = vmatpush1.xpose.msra.mxu0 0.0
    %489 = vmatprep.subr.mxu0 0.0
    %490 = vmatpush1.xpose.msra.mxu0 0.0
    %491 = vmatprep.subr.mxu0 0.0
    %492 = vmatpush1.xpose.msra.mxu0 0.0
    %493 = vmatprep.subr.mxu0 0.0
    %494 = vmatpush1.xpose.msra.mxu0 0.0
    %495 = vmatprep.subr.mxu0 0.0
    %496 = vmatpush1.xpose.msra.mxu0 0.0
    %497 = vmatprep.subr.mxu0 0.0
    %498 = vmatpush1.xpose.msra.mxu0 0.0
    %499 = vmatprep.subr.mxu0 0.0
    %500 = vmatpush1.xpose.msra.mxu0 0.0
    %501 = vmatprep.subr.mxu0 0.0
    %502 = vmatpush1.xpose.msra.mxu0 0.0
    %503 = vmatprep.subr.mxu0 0.0
    %504 = vmatpush1.xpose.msra.mxu0 0.0
    %505 = vmatprep.subr.mxu0 0.0
    %506 = vmatpush1.xpose.msra.mxu0 0.0
    %507 = vmatprep.subr.mxu0 0.0
    %508 = vmatpush1.xpose.msra.mxu0 0.0
    %509 = vmatprep.subr.mxu0 0.0
    %510 = vmatpush1.xpose.msra.mxu0 0.0
    %511 = vmatprep.subr.mxu0 0.0
    %512 = vmatpush1.xpose.msra.mxu0 0.0
    %513 = vmatprep.subr.mxu0 0.0
    %514 = vmatpush1.xpose.msra.mxu0 0.0
    %515 = vmatprep.subr.mxu0 0.0
    %516 = vmatpush1.xpose.msra.mxu0 0.0
    %517 = vmatprep.subr.mxu0 0.0
    %518 = vmatpush1.xpose.msra.mxu0 0.0
    %519 = vmatprep.mubr.f32.mxu0 0.0
    %520 = vmatmul.mubr.f32.gmra.mrb[0].mxu0 %v146
    %v521 = vpop.f32.mrb[0].mxu0
    %v522 = vadd.f32 0.0, %v521
    %v523 = vpop.f32.mrb[0].mxu0
    %524 = vdwg.mxu0
    %525 = vmatprep.subr.mxu0 0.0
    %526 = vmatpush1.xpose.msra.mxu0 %v424
    %527 = vmatprep.subr.mxu0 0.0
    %528 = vmatpush1.xpose.msra.mxu0 %v426
    %529 = vmatprep.subr.mxu0 0.0
    %530 = vmatpush1.xpose.msra.mxu0 %v428
    %531 = vmatprep.subr.mxu0 0.0
    %532 = vmatpush1.xpose.msra.mxu0 %v430
    %533 = vmatprep.subr.mxu0 0.0
    %534 = vmatpush1.xpose.msra.mxu0 %v432
    %535 = vmatprep.subr.mxu0 0.0
    %536 = vmatpush1.xpose.msra.mxu0 %v434
    %537 = vmatprep.subr.mxu0 0.0
    %538 = vmatpush1.xpose.msra.mxu0 %v436
    %539 = vmatprep.subr.mxu0 0.0
    %540 = vmatpush1.xpose.msra.mxu0 %v438
    %541 = vmatprep.subr.mxu0 0.0
    %542 = vmatpush1.xpose.msra.mxu0 %v440
    %543 = vmatprep.subr.mxu0 0.0
    %544 = vmatpush1.xpose.msra.mxu0 %v442
    %545 = vmatprep.subr.mxu0 0.0
    %546 = vmatpush1.xpose.msra.mxu0 %v444
    %547 = vmatprep.subr.mxu0 0.0
    %548 = vmatpush1.xpose.msra.mxu0 %v446
    %549 = vmatprep.subr.mxu0 0.0
    %550 = vmatpush1.xpose.msra.mxu0 %v448
    %551 = vmatprep.subr.mxu0 0.0
    %552 = vmatpush1.xpose.msra.mxu0 %v450
    %553 = vmatprep.subr.mxu0 0.0
    %554 = vmatpush1.xpose.msra.mxu0 %v452
    %555 = vmatprep.subr.mxu0 0.0
    %556 = vmatpush1.xpose.msra.mxu0 %v454
    %557 = vmatprep.subr.mxu0 0.0
    %558 = vmatpush1.xpose.msra.mxu0 0.0
    %559 = vmatprep.subr.mxu0 0.0
    %560 = vmatpush1.xpose.msra.mxu0 0.0
    %561 = vmatprep.subr.mxu0 0.0
    %562 = vmatpush1.xpose.msra.mxu0 0.0
    %563 = vmatprep.subr.mxu0 0.0
    %564 = vmatpush1.xpose.msra.mxu0 0.0
    %565 = vmatprep.subr.mxu0 0.0
    %566 = vmatpush1.xpose.msra.mxu0 0.0
    %567 = vmatprep.subr.mxu0 0.0
    %568 = vmatpush1.xpose.msra.mxu0 0.0
    %569 = vmatprep.subr.mxu0 0.0
    %570 = vmatpush1.xpose.msra.mxu0 0.0
    %571 = vmatprep.subr.mxu0 0.0
    %572 = vmatpush1.xpose.msra.mxu0 0.0
    %573 = vmatprep.subr.mxu0 0.0
    %574 = vmatpush1.xpose.msra.mxu0 0.0
    %575 = vmatprep.subr.mxu0 0.0
    %576 = vmatpush1.xpose.msra.mxu0 0.0
    %577 = vmatprep.subr.mxu0 0.0
    %578 = vmatpush1.xpose.msra.mxu0 0.0
    %579 = vmatprep.subr.mxu0 0.0
    %580 = vmatpush1.xpose.msra.mxu0 0.0
    %581 = vmatprep.subr.mxu0 0.0
    %582 = vmatpush1.xpose.msra.mxu0 0.0
    %583 = vmatprep.subr.mxu0 0.0
    %584 = vmatpush1.xpose.msra.mxu0 0.0
    %585 = vmatprep.subr.mxu0 0.0
    %586 = vmatpush1.xpose.msra.mxu0 0.0
    %587 = vmatprep.subr.mxu0 0.0
    %588 = vmatpush1.xpose.msra.mxu0 0.0
    %589 = vmatprep.mubr.f32.mxu0 0.0
    %590 = vmatmul.mubr.f32.gmra.mrb[0].mxu0 1.0
    %v591 = vpop.f32.mrb[0].mxu0
    %v592 = vadd.f32 0.0, %v591
    %v593 = vpop.f32.mrb[0].mxu0
    %594 = vdwg.mxu0
    %v595 = vrcp.pop %v592
    %v596 = vlaneseq
    %v597 = vshrl.u32 %v596, 7
    %v598 = vsub.s32 0, %v597
    %v599 = vrot.slane %v595, %v598
    %v600 = vmul.f32 %v522, %v599
    %602 = vset.pattern.permute.xlu0 0
    %603 = vperm.xlu0 %602, %v36
    %v604 = vpop.permute.xlu0 %603
    %607 = vset.pattern.permute.xlu0 0
    %608 = vperm.xlu0 %607, %v37
    %v609 = vpop.permute.xlu0 %608
    %612 = vset.pattern.permute.xlu0 0
    %613 = vperm.xlu0 %612, %v38
    %v614 = vpop.permute.xlu0 %613
    %617 = vset.pattern.permute.xlu0 0
    %618 = vperm.xlu0 %617, %v39
    %v619 = vpop.permute.xlu0 %618
    %v622 = vsel %vm181, %v32, 0
    %v625 = vsel %vm181, %v33, 0
    %v628 = vsel %vm181, %v34, 0
    %v631 = vsel %vm181, %v35, 0
    %633 = vmatprep.subr.mxu0 0.0
    %634 = vmatpush1.msra.mxu0 %v600
    %635 = vmatprep.subr.mxu0 0.0
    %636 = vmatpush1.msra.mxu0 0.0
    %637 = vmatprep.subr.mxu0 0.0
    %638 = vmatpush1.msra.mxu0 0.0
    %639 = vmatprep.subr.mxu0 0.0
    %640 = vmatpush1.msra.mxu0 0.0
    %641 = vmatprep.subr.mxu0 0.0
    %642 = vmatpush1.msra.mxu0 0.0
    %643 = vmatprep.subr.mxu0 0.0
    %644 = vmatpush1.msra.mxu0 0.0
    %645 = vmatprep.subr.mxu0 0.0
    %646 = vmatpush1.msra.mxu0 0.0
    %647 = vmatprep.subr.mxu0 0.0
    %648 = vmatpush1.msra.mxu0 0.0
    %649 = vmatprep.subr.mxu0 0.0
    %650 = vmatpush1.msra.mxu0 0.0
    %651 = vmatprep.subr.mxu0 0.0
    %652 = vmatpush1.msra.mxu0 0.0
    %653 = vmatprep.subr.mxu0 0.0
    %654 = vmatpush1.msra.mxu0 0.0
    %655 = vmatprep.subr.mxu0 0.0
    %656 = vmatpush1.msra.mxu0 0.0
    %657 = vmatprep.subr.mxu0 0.0
    %658 = vmatpush1.msra.mxu0 0.0
    %659 = vmatprep.subr.mxu0 0.0
    %660 = vmatpush1.msra.mxu0 0.0
    %661 = vmatprep.subr.mxu0 0.0
    %662 = vmatpush1.msra.mxu0 0.0
    %663 = vmatprep.subr.mxu0 0.0
    %664 = vmatpush1.msra.mxu0 0.0
    %665 = vmatprep.subr.mxu0 0.0
    %666 = vmatpush1.msra.mxu0 0.0
    %667 = vmatprep.subr.mxu0 0.0
    %668 = vmatpush1.msra.mxu0 0.0
    %669 = vmatprep.subr.mxu0 0.0
    %670 = vmatpush1.msra.mxu0 0.0
    %671 = vmatprep.subr.mxu0 0.0
    %672 = vmatpush1.msra.mxu0 0.0
    %673 = vmatprep.subr.mxu0 0.0
    %674 = vmatpush1.msra.mxu0 0.0
    %675 = vmatprep.subr.mxu0 0.0
    %676 = vmatpush1.msra.mxu0 0.0
    %677 = vmatprep.subr.mxu0 0.0
    %678 = vmatpush1.msra.mxu0 0.0
    %679 = vmatprep.subr.mxu0 0.0
    %680 = vmatpush1.msra.mxu0 0.0
    %681 = vmatprep.subr.mxu0 0.0
    %682 = vmatpush1.msra.mxu0 0.0
    %683 = vmatprep.subr.mxu0 0.0
    %684 = vmatpush1.msra.mxu0 0.0
    %685 = vmatprep.subr.mxu0 0.0
    %686 = vmatpush1.msra.mxu0 0.0
    %687 = vmatprep.subr.mxu0 0.0
    %688 = vmatpush1.msra.mxu0 0.0
    %689 = vmatprep.subr.mxu0 0.0
    %690 = vmatpush1.msra.mxu0 0.0
    %691 = vmatprep.subr.mxu0 0.0
    %692 = vmatpush1.msra.mxu0 0.0
    %693 = vmatprep.subr.mxu0 0.0
    %694 = vmatpush1.msra.mxu0 0.0
    %695 = vmatprep.subr.mxu0 0.0
    %696 = vmatpush1.msra.mxu0 0.0
    %697 = vmatprep.mubr.f32.mxu0 0.0
    %698 = vmatmul.mubr.f32.gmra.mrb[0].mxu0 %v622
    %v699 = vpop.f32.mrb[0].mxu0
    %v700 = vadd.f32 %v604, %v699
    %v701 = vpop.f32.mrb[0].mxu0
    %702 = vmatprep.mubr.f32.mxu0 0.0
    %703 = vmatmul.mubr.f32.gmra.mrb[0].mxu0 %v625
    %v704 = vpop.f32.mrb[0].mxu0
    %v705 = vadd.f32 %v609, %v704
    %v706 = vpop.f32.mrb[0].mxu0
    %707 = vmatprep.mubr.f32.mxu0 0.0
    %708 = vmatmul.mubr.f32.gmra.mrb[0].mxu0 %v628
    %v709 = vpop.f32.mrb[0].mxu0
    %v710 = vadd.f32 %v614, %v709
    %v711 = vpop.f32.mrb[0].mxu0
    %712 = vmatprep.mubr.f32.mxu0 0.0
    %713 = vmatmul.mubr.f32.gmra.mrb[0].mxu0 %v631
    %v714 = vpop.f32.mrb[0].mxu0
    %v715 = vadd.f32 %v619, %v714
    %v716 = vpop.f32.mrb[0].mxu0
    %717 = vdwg.mxu0
    %v718 = vstv %s25
    %v719 = vmul.f32 %v718, %v700
    %v720 = vmul.f32 %v718, %v705
    %v721 = vmul.f32 %v718, %v710
    %v722 = vmul.f32 %v718, %v715
    %v723 = vadd.f32 %v719, %v40
    %v724 = vadd.f32 %v720, %v41
    %v725 = vadd.f32 %v721, %v42
    %v726 = vadd.f32 %v722, %v43
    %727 = vst [vmem:[#allocation3] sm:$0xff] %v723
    %728 = vst [vmem:[#allocation3 + $0x8] sm:$0xff] %v724
    %729 = vst [vmem:[#allocation3 + $0x10] sm:$0xff] %v725
    %730 = vst [vmem:[#allocation3 + $0x18] sm:$0xff] %v726
    %s731 = scalar_lea.vmem %s0, 32
    %v732 = vld [vmem:[%s731] sm:$0xff]
    %v733 = vld [vmem:[%s731 + $0x8] sm:$0xff]
    %v734 = vld [vmem:[%s731 + $0x10] sm:$0xff]
    %v735 = vld [vmem:[%s731 + $0x18] sm:$0xff]
    %736 = vmatprep.subr.mxu0 0.0
    %737 = vmatpush1.msra.mxu0 %v732
    %738 = vmatprep.subr.mxu0 0.0
    %739 = vmatpush1.msra.mxu0 %v733
    %740 = vmatprep.subr.mxu0 0.0
    %741 = vmatpush1.msra.mxu0 %v734
    %742 = vmatprep.subr.mxu0 0.0
    %743 = vmatpush1.msra.mxu0 %v735
    %744 = vmatprep.subr.mxu0 0.0
    %745 = vmatpush1.msra.mxu0 0.0
    %746 = vmatprep.subr.mxu0 0.0
    %747 = vmatpush1.msra.mxu0 0.0
    %748 = vmatprep.subr.mxu0 0.0
    %749 = vmatpush1.msra.mxu0 0.0
    %750 = vmatprep.subr.mxu0 0.0
    %751 = vmatpush1.msra.mxu0 0.0
    %752 = vmatprep.subr.mxu0 0.0
    %753 = vmatpush1.msra.mxu0 0.0
    %754 = vmatprep.subr.mxu0 0.0
    %755 = vmatpush1.msra.mxu0 0.0
    %756 = vmatprep.subr.mxu0 0.0
    %757 = vmatpush1.msra.mxu0 0.0
    %758 = vmatprep.subr.mxu0 0.0
    %759 = vmatpush1.msra.mxu0 0.0
    %760 = vmatprep.subr.mxu0 0.0
    %761 = vmatpush1.msra.mxu0 0.0
    %762 = vmatprep.subr.mxu0 0.0
    %763 = vmatpush1.msra.mxu0 0.0
    %764 = vmatprep.subr.mxu0 0.0
    %765 = vmatpush1.msra.mxu0 0.0
    %766 = vmatprep.subr.mxu0 0.0
    %767 = vmatpush1.msra.mxu0 0.0
    %768 = vmatprep.subr.mxu0 0.0
    %769 = vmatpush1.msra.mxu0 0.0
    %770 = vmatprep.subr.mxu0 0.0
    %771 = vmatpush1.msra.mxu0 0.0
    %772 = vmatprep.subr.mxu0 0.0
    %773 = vmatpush1.msra.mxu0 0.0
    %774 = vmatprep.subr.mxu0 0.0
    %775 = vmatpush1.msra.mxu0 0.0
    %776 = vmatprep.subr.mxu0 0.0
    %777 = vmatpush1.msra.mxu0 0.0
    %778 = vmatprep.subr.mxu0 0.0
    %779 = vmatpush1.msra.mxu0 0.0
    %780 = vmatprep.subr.mxu0 0.0
    %781 = vmatpush1.msra.mxu0 0.0
    %782 = vmatprep.subr.mxu0 0.0
    %783 = vmatpush1.msra.mxu0 0.0
    %784 = vmatprep.subr.mxu0 0.0
    %785 = vmatpush1.msra.mxu0 0.0
    %786 = vmatprep.subr.mxu0 0.0
    %787 = vmatpush1.msra.mxu0 0.0
    %788 = vmatprep.subr.mxu0 0.0
    %789 = vmatpush1.msra.mxu0 0.0
    %790 = vmatprep.subr.mxu0 0.0
    %791 = vmatpush1.msra.mxu0 0.0
    %792 = vmatprep.subr.mxu0 0.0
    %793 = vmatpush1.msra.mxu0 0.0
    %794 = vmatprep.subr.mxu0 0.0
    %795 = vmatpush1.msra.mxu0 0.0
    %796 = vmatprep.subr.mxu0 0.0
    %797 = vmatpush1.msra.mxu0 0.0
    %798 = vmatprep.subr.mxu0 0.0
    %799 = vmatpush1.msra.mxu0 0.0
    %800 = vmatprep.mubr.f32.mxu0 0.0
    %801 = vmatmul.mubr.f32.gmra.mrb[0].mxu0 %v61
    %v802 = vpop.f32.mrb[0].mxu0
    %v803 = vadd.f32 %v47, %v802
    %v804 = vpop.f32.mrb[0].mxu0
    %805 = vmatprep.mubr.f32.mxu0 0.0
    %806 = vmatmul.mubr.f32.gmra.mrb[0].mxu0 %v64
    %v807 = vpop.f32.mrb[0].mxu0
    %v808 = vadd.f32 %v52, %v807
    %v809 = vpop.f32.mrb[0].mxu0
    %810 = vmatprep.mubr.f32.mxu0 0.0
    %811 = vmatmul.mubr.f32.gmra.mrb[0].mxu0 %v67
    %v812 = vpop.f32.mrb[0].mxu0
    %v813 = vadd.f32 %v57, %v812
    %v814 = vpop.f32.mrb[0].mxu0
    %815 = vdwg.mxu0
    %816 = vxpose.xlu0.b32.start [1/16] %v803, 128
    %817 = vxpose.xlu0.b32.cont [2/16] 0.0, 128
    %818 = vxpose.xlu0.b32.cont [3/16] 0.0, 128
    %819 = vxpose.xlu0.b32.cont [4/16] 0.0, 128
    %820 = vxpose.xlu0.b32.cont [5/16] 0.0, 128
    %821 = vxpose.xlu0.b32.cont [6/16] 0.0, 128
    %822 = vxpose.xlu0.b32.cont [7/16] 0.0, 128
    %823 = vxpose.xlu0.b32.cont [8/16] 0.0, 128
    %824 = vxpose.xlu0.b32.cont [9/16] 0.0, 128
    %825 = vxpose.xlu0.b32.cont [10/16] 0.0, 128
    %826 = vxpose.xlu0.b32.cont [11/16] 0.0, 128
    %827 = vxpose.xlu0.b32.cont [12/16] 0.0, 128
    %828 = vxpose.xlu0.b32.cont [13/16] 0.0, 128
    %829 = vxpose.xlu0.b32.cont [14/16] 0.0, 128
    %830 = vxpose.xlu0.b32.cont [15/16] 0.0, 128
    %831 = vxpose.xlu0.b32.end [16/16] 0.0, 128
    %v832 = vpop.trf.xlu0
    %v833 = vpop.trf.xlu0
    %v834 = vpop.trf.xlu0
    %v835 = vpop.trf.xlu0
    %v836 = vpop.trf.xlu0
    %v837 = vpop.trf.xlu0
    %v838 = vpop.trf.xlu0
    %v839 = vpop.trf.xlu0
    %v840 = vpop.trf.xlu0
    %v841 = vpop.trf.xlu0
    %v842 = vpop.trf.xlu0
    %v843 = vpop.trf.xlu0
    %v844 = vpop.trf.xlu0
    %v845 = vpop.trf.xlu0
    %v846 = vpop.trf.xlu0
    %v847 = vpop.trf.xlu0
    %v849 = vsel %vm181, %v832, 0
    %v852 = vsel %vm181, %v833, 0
    %v855 = vsel %vm181, %v834, 0
    %v858 = vsel %vm181, %v835, 0
    %v861 = vsel %vm181, %v836, 0
    %v864 = vsel %vm181, %v837, 0
    %v867 = vsel %vm181, %v838, 0
    %v870 = vsel %vm181, %v839, 0
    %v873 = vsel %vm181, %v840, 0
    %v876 = vsel %vm181, %v841, 0
    %v879 = vsel %vm181, %v842, 0
    %v882 = vsel %vm181, %v843, 0
    %v885 = vsel %vm181, %v844, 0
    %v888 = vsel %vm181, %v845, 0
    %v891 = vsel %vm181, %v846, 0
    %v894 = vsel %vm181, %v847, 0
    %896 = vmatprep.subr.mxu0 0.0
    %897 = vmatpush1.msra.mxu0 %v808
    %898 = vmatprep.subr.mxu0 0.0
    %899 = vmatpush1.msra.mxu0 0.0
    %900 = vmatprep.subr.mxu0 0.0
    %901 = vmatpush1.msra.mxu0 0.0
    %902 = vmatprep.subr.mxu0 0.0
    %903 = vmatpush1.msra.mxu0 0.0
    %904 = vmatprep.subr.mxu0 0.0
    %905 = vmatpush1.msra.mxu0 0.0
    %906 = vmatprep.subr.mxu0 0.0
    %907 = vmatpush1.msra.mxu0 0.0
    %908 = vmatprep.subr.mxu0 0.0
    %909 = vmatpush1.msra.mxu0 0.0
    %910 = vmatprep.subr.mxu0 0.0
    %911 = vmatpush1.msra.mxu0 0.0
    %912 = vmatprep.subr.mxu0 0.0
    %913 = vmatpush1.msra.mxu0 0.0
    %914 = vmatprep.subr.mxu0 0.0
    %915 = vmatpush1.msra.mxu0 0.0
    %916 = vmatprep.subr.mxu0 0.0
    %917 = vmatpush1.msra.mxu0 0.0
    %918 = vmatprep.subr.mxu0 0.0
    %919 = vmatpush1.msra.mxu0 0.0
    %920 = vmatprep.subr.mxu0 0.0
    %921 = vmatpush1.msra.mxu0 0.0
    %922 = vmatprep.subr.mxu0 0.0
    %923 = vmatpush1.msra.mxu0 0.0
    %924 = vmatprep.subr.mxu0 0.0
    %925 = vmatpush1.msra.mxu0 0.0
    %926 = vmatprep.subr.mxu0 0.0
    %927 = vmatpush1.msra.mxu0 0.0
    %928 = vmatprep.subr.mxu0 0.0
    %929 = vmatpush1.msra.mxu0 0.0
    %930 = vmatprep.subr.mxu0 0.0
    %931 = vmatpush1.msra.mxu0 0.0
    %932 = vmatprep.subr.mxu0 0.0
    %933 = vmatpush1.msra.mxu0 0.0
    %934 = vmatprep.subr.mxu0 0.0
    %935 = vmatpush1.msra.mxu0 0.0
    %936 = vmatprep.subr.mxu0 0.0
    %937 = vmatpush1.msra.mxu0 0.0
    %938 = vmatprep.subr.mxu0 0.0
    %939 = vmatpush1.msra.mxu0 0.0
    %940 = vmatprep.subr.mxu0 0.0
    %941 = vmatpush1.msra.mxu0 0.0
    %942 = vmatprep.subr.mxu0 0.0
    %943 = vmatpush1.msra.mxu0 0.0
    %944 = vmatprep.subr.mxu0 0.0
    %945 = vmatpush1.msra.mxu0 0.0
    %946 = vmatprep.subr.mxu0 0.0
    %947 = vmatpush1.msra.mxu0 0.0
    %948 = vmatprep.subr.mxu0 0.0
    %949 = vmatpush1.msra.mxu0 0.0
    %950 = vmatprep.subr.mxu0 0.0
    %951 = vmatpush1.msra.mxu0 0.0
    %952 = vmatprep.subr.mxu0 0.0
    %953 = vmatpush1.msra.mxu0 0.0
    %954 = vmatprep.subr.mxu0 0.0
    %955 = vmatpush1.msra.mxu0 0.0
    %956 = vmatprep.subr.mxu0 0.0
    %957 = vmatpush1.msra.mxu0 0.0
    %958 = vmatprep.subr.mxu0 0.0
    %959 = vmatpush1.msra.mxu0 0.0
    %960 = vmatprep.mubr.f32.mxu0 0.0
    %961 = vmatmul.mubr.f32.gmra.mrb[0].mxu0 %v849
    %v962 = vpop.f32.mrb[0].mxu0
    %v963 = vadd.f32 0.0, %v962
    %v964 = vpop.f32.mrb[0].mxu0
    %965 = vmatprep.mubr.f32.mxu0 0.0
    %966 = vmatmul.mubr.f32.gmra.mrb[0].mxu0 %v852
    %v967 = vpop.f32.mrb[0].mxu0
    %v968 = vadd.f32 0.0, %v967
    %v969 = vpop.f32.mrb[0].mxu0
    %970 = vmatprep.mubr.f32.mxu0 0.0
    %971 = vmatmul.mubr.f32.gmra.mrb[0].mxu0 %v855
    %v972 = vpop.f32.mrb[0].mxu0
    %v973 = vadd.f32 0.0, %v972
    %v974 = vpop.f32.mrb[0].mxu0
    %975 = vmatprep.mubr.f32.mxu0 0.0
    %976 = vmatmul.mubr.f32.gmra.mrb[0].mxu0 %v858
    %v977 = vpop.f32.mrb[0].mxu0
    %v978 = vadd.f32 0.0, %v977
    %v979 = vpop.f32.mrb[0].mxu0
    %980 = vmatprep.mubr.f32.mxu0 0.0
    %981 = vmatmul.mubr.f32.gmra.mrb[0].mxu0 %v861
    %v982 = vpop.f32.mrb[0].mxu0
    %v983 = vadd.f32 0.0, %v982
    %v984 = vpop.f32.mrb[0].mxu0
    %985 = vmatprep.mubr.f32.mxu0 0.0
    %986 = vmatmul.mubr.f32.gmra.mrb[0].mxu0 %v864
    %v987 = vpop.f32.mrb[0].mxu0
    %v988 = vadd.f32 0.0, %v987
    %v989 = vpop.f32.mrb[0].mxu0
    %990 = vmatprep.mubr.f32.mxu0 0.0
    %991 = vmatmul.mubr.f32.gmra.mrb[0].mxu0 %v867
    %v992 = vpop.f32.mrb[0].mxu0
    %v993 = vadd.f32 0.0, %v992
    %v994 = vpop.f32.mrb[0].mxu0
    %995 = vmatprep.mubr.f32.mxu0 0.0
    %996 = vmatmul.mubr.f32.gmra.mrb[0].mxu0 %v870
    %v997 = vpop.f32.mrb[0].mxu0
    %v998 = vadd.f32 0.0, %v997
    %v999 = vpop.f32.mrb[0].mxu0
    %1000 = vmatprep.mubr.f32.mxu0 0.0
    %1001 = vmatmul.mubr.f32.gmra.mrb[0].mxu0 %v873
    %v1002 = vpop.f32.mrb[0].mxu0
    %v1003 = vadd.f32 0.0, %v1002
    %v1004 = vpop.f32.mrb[0].mxu0
    %1005 = vmatprep.mubr.f32.mxu0 0.0
    %1006 = vmatmul.mubr.f32.gmra.mrb[0].mxu0 %v876
    %v1007 = vpop.f32.mrb[0].mxu0
    %v1008 = vadd.f32 0.0, %v1007
    %v1009 = vpop.f32.mrb[0].mxu0
    %1010 = vmatprep.mubr.f32.mxu0 0.0
    %1011 = vmatmul.mubr.f32.gmra.mrb[0].mxu0 %v879
    %v1012 = vpop.f32.mrb[0].mxu0
    %v1013 = vadd.f32 0.0, %v1012
    %v1014 = vpop.f32.mrb[0].mxu0
    %1015 = vmatprep.mubr.f32.mxu0 0.0
    %1016 = vmatmul.mubr.f32.gmra.mrb[0].mxu0 %v882
    %v1017 = vpop.f32.mrb[0].mxu0
    %v1018 = vadd.f32 0.0, %v1017
    %v1019 = vpop.f32.mrb[0].mxu0
    %1020 = vmatprep.mubr.f32.mxu0 0.0
    %1021 = vmatmul.mubr.f32.gmra.mrb[0].mxu0 %v885
    %v1022 = vpop.f32.mrb[0].mxu0
    %v1023 = vadd.f32 0.0, %v1022
    %v1024 = vpop.f32.mrb[0].mxu0
    %1025 = vmatprep.mubr.f32.mxu0 0.0
    %1026 = vmatmul.mubr.f32.gmra.mrb[0].mxu0 %v888
    %v1027 = vpop.f32.mrb[0].mxu0
    %v1028 = vadd.f32 0.0, %v1027
    %v1029 = vpop.f32.mrb[0].mxu0
    %1030 = vmatprep.mubr.f32.mxu0 0.0
    %1031 = vmatmul.mubr.f32.gmra.mrb[0].mxu0 %v891
    %v1032 = vpop.f32.mrb[0].mxu0
    %v1033 = vadd.f32 0.0, %v1032
    %v1034 = vpop.f32.mrb[0].mxu0
    %1035 = vmatprep.mubr.f32.mxu0 0.0
    %1036 = vmatmul.mubr.f32.gmra.mrb[0].mxu0 %v894
    %v1037 = vpop.f32.mrb[0].mxu0
    %v1038 = vadd.f32 0.0, %v1037
    %v1039 = vpop.f32.mrb[0].mxu0
    %1040 = vdwg.mxu0
    %1041 = vmax.xlane.f32.xlu0 %v963
    %v1042 = vpop.xlane.xlu0 %1041
    %1043 = vmax.xlane.f32.xlu0 %v968
    %v1044 = vpop.xlane.xlu0 %1043
    %1045 = vmax.xlane.f32.xlu0 %v973
    %v1046 = vpop.xlane.xlu0 %1045
    %1047 = vmax.xlane.f32.xlu0 %v978
    %v1048 = vpop.xlane.xlu0 %1047
    %1049 = vmax.xlane.f32.xlu0 %v983
    %v1050 = vpop.xlane.xlu0 %1049
    %1051 = vmax.xlane.f32.xlu0 %v988
    %v1052 = vpop.xlane.xlu0 %1051
    %1053 = vmax.xlane.f32.xlu0 %v993
    %v1054 = vpop.xlane.xlu0 %1053
    %1055 = vmax.xlane.f32.xlu0 %v998
    %v1056 = vpop.xlane.xlu0 %1055
    %1057 = vmax.xlane.f32.xlu0 %v1003
    %v1058 = vpop.xlane.xlu0 %1057
    %1059 = vmax.xlane.f32.xlu0 %v1008
    %v1060 = vpop.xlane.xlu0 %1059
    %1061 = vmax.xlane.f32.xlu0 %v1013
    %v1062 = vpop.xlane.xlu0 %1061
    %1063 = vmax.xlane.f32.xlu0 %v1018
    %v1064 = vpop.xlane.xlu0 %1063
    %1065 = vmax.xlane.f32.xlu0 %v1023
    %v1066 = vpop.xlane.xlu0 %1065
    %1067 = vmax.xlane.f32.xlu0 %v1028
    %v1068 = vpop.xlane.xlu0 %1067
    %1069 = vmax.xlane.f32.xlu0 %v1033
    %v1070 = vpop.xlane.xlu0 %1069
    %1071 = vmax.xlane.f32.xlu0 %v1038
    %v1072 = vpop.xlane.xlu0 %1071
    %v1073 = vsub.f32 %v963, %v1042
    %v1074 = vsub.f32 %v968, %v1044
    %v1075 = vsub.f32 %v973, %v1046
    %v1076 = vsub.f32 %v978, %v1048
    %v1077 = vsub.f32 %v983, %v1050
    %v1078 = vsub.f32 %v988, %v1052
    %v1079 = vsub.f32 %v993, %v1054
    %v1080 = vsub.f32 %v998, %v1056
    %v1081 = vsub.f32 %v1003, %v1058
    %v1082 = vsub.f32 %v1008, %v1060
    %v1083 = vsub.f32 %v1013, %v1062
    %v1084 = vsub.f32 %v1018, %v1064
    %v1085 = vsub.f32 %v1023, %v1066
    %v1086 = vsub.f32 %v1028, %v1068
    %v1087 = vsub.f32 %v1033, %v1070
    %v1088 = vsub.f32 %v1038, %v1072
    %v1089 = vmul.f32 %v1073, 1.442695
    %v1090 = vpow.pop %v1089
    %v1091 = vmul.f32 %v1074, 1.442695
    %v1092 = vpow.pop %v1091
    %v1093 = vmul.f32 %v1075, 1.442695
    %v1094 = vpow.pop %v1093
    %v1095 = vmul.f32 %v1076, 1.442695
    %v1096 = vpow.pop %v1095
    %v1097 = vmul.f32 %v1077, 1.442695
    %v1098 = vpow.pop %v1097
    %v1099 = vmul.f32 %v1078, 1.442695
    %v1100 = vpow.pop %v1099
    %v1101 = vmul.f32 %v1079, 1.442695
    %v1102 = vpow.pop %v1101
    %v1103 = vmul.f32 %v1080, 1.442695
    %v1104 = vpow.pop %v1103
    %v1105 = vmul.f32 %v1081, 1.442695
    %v1106 = vpow.pop %v1105
    %v1107 = vmul.f32 %v1082, 1.442695
    %v1108 = vpow.pop %v1107
    %v1109 = vmul.f32 %v1083, 1.442695
    %v1110 = vpow.pop %v1109
    %v1111 = vmul.f32 %v1084, 1.442695
    %v1112 = vpow.pop %v1111
    %v1113 = vmul.f32 %v1085, 1.442695
    %v1114 = vpow.pop %v1113
    %v1115 = vmul.f32 %v1086, 1.442695
    %v1116 = vpow.pop %v1115
    %v1117 = vmul.f32 %v1087, 1.442695
    %v1118 = vpow.pop %v1117
    %v1119 = vmul.f32 %v1088, 1.442695
    %v1120 = vpow.pop %v1119
    %1121 = vmatprep.subr.mxu0 0.0
    %1122 = vmatpush1.xpose.msra.mxu0 %v1090
    %1123 = vmatprep.subr.mxu0 0.0
    %1124 = vmatpush1.xpose.msra.mxu0 %v1092
    %1125 = vmatprep.subr.mxu0 0.0
    %1126 = vmatpush1.xpose.msra.mxu0 %v1094
    %1127 = vmatprep.subr.mxu0 0.0
    %1128 = vmatpush1.xpose.msra.mxu0 %v1096
    %1129 = vmatprep.subr.mxu0 0.0
    %1130 = vmatpush1.xpose.msra.mxu0 %v1098
    %1131 = vmatprep.subr.mxu0 0.0
    %1132 = vmatpush1.xpose.msra.mxu0 %v1100
    %1133 = vmatprep.subr.mxu0 0.0
    %1134 = vmatpush1.xpose.msra.mxu0 %v1102
    %1135 = vmatprep.subr.mxu0 0.0
    %1136 = vmatpush1.xpose.msra.mxu0 %v1104
    %1137 = vmatprep.subr.mxu0 0.0
    %1138 = vmatpush1.xpose.msra.mxu0 %v1106
    %1139 = vmatprep.subr.mxu0 0.0
    %1140 = vmatpush1.xpose.msra.mxu0 %v1108
    %1141 = vmatprep.subr.mxu0 0.0
    %1142 = vmatpush1.xpose.msra.mxu0 %v1110
    %1143 = vmatprep.subr.mxu0 0.0
    %1144 = vmatpush1.xpose.msra.mxu0 %v1112
    %1145 = vmatprep.subr.mxu0 0.0
    %1146 = vmatpush1.xpose.msra.mxu0 %v1114
    %1147 = vmatprep.subr.mxu0 0.0
    %1148 = vmatpush1.xpose.msra.mxu0 %v1116
    %1149 = vmatprep.subr.mxu0 0.0
    %1150 = vmatpush1.xpose.msra.mxu0 %v1118
    %1151 = vmatprep.subr.mxu0 0.0
    %1152 = vmatpush1.xpose.msra.mxu0 %v1120
    %1153 = vmatprep.subr.mxu0 0.0
    %1154 = vmatpush1.xpose.msra.mxu0 0.0
    %1155 = vmatprep.subr.mxu0 0.0
    %1156 = vmatpush1.xpose.msra.mxu0 0.0
    %1157 = vmatprep.subr.mxu0 0.0
    %1158 = vmatpush1.xpose.msra.mxu0 0.0
    %1159 = vmatprep.subr.mxu0 0.0
    %1160 = vmatpush1.xpose.msra.mxu0 0.0
    %1161 = vmatprep.subr.mxu0 0.0
    %1162 = vmatpush1.xpose.msra.mxu0 0.0
    %1163 = vmatprep.subr.mxu0 0.0
    %1164 = vmatpush1.xpose.msra.mxu0 0.0
    %1165 = vmatprep.subr.mxu0 0.0
    %1166 = vmatpush1.xpose.msra.mxu0 0.0
    %1167 = vmatprep.subr.mxu0 0.0
    %1168 = vmatpush1.xpose.msra.mxu0 0.0
    %1169 = vmatprep.subr.mxu0 0.0
    %1170 = vmatpush1.xpose.msra.mxu0 0.0
    %1171 = vmatprep.subr.mxu0 0.0
    %1172 = vmatpush1.xpose.msra.mxu0 0.0
    %1173 = vmatprep.subr.mxu0 0.0
    %1174 = vmatpush1.xpose.msra.mxu0 0.0
    %1175 = vmatprep.subr.mxu0 0.0
    %1176 = vmatpush1.xpose.msra.mxu0 0.0
    %1177 = vmatprep.subr.mxu0 0.0
    %1178 = vmatpush1.xpose.msra.mxu0 0.0
    %1179 = vmatprep.subr.mxu0 0.0
    %1180 = vmatpush1.xpose.msra.mxu0 0.0
    %1181 = vmatprep.subr.mxu0 0.0
    %1182 = vmatpush1.xpose.msra.mxu0 0.0
    %1183 = vmatprep.subr.mxu0 0.0
    %1184 = vmatpush1.xpose.msra.mxu0 0.0
    %1185 = vmatprep.mubr.f32.mxu0 0.0
    %1186 = vmatmul.mubr.f32.gmra.mrb[0].mxu0 %v813
    %v1187 = vpop.f32.mrb[0].mxu0
    %v1188 = vadd.f32 0.0, %v1187
    %v1189 = vpop.f32.mrb[0].mxu0
    %1190 = vdwg.mxu0
    %1191 = vmatprep.subr.mxu0 0.0
    %1192 = vmatpush1.xpose.msra.mxu0 %v1090
    %1193 = vmatprep.subr.mxu0 0.0
    %1194 = vmatpush1.xpose.msra.mxu0 %v1092
    %1195 = vmatprep.subr.mxu0 0.0
    %1196 = vmatpush1.xpose.msra.mxu0 %v1094
    %1197 = vmatprep.subr.mxu0 0.0
    %1198 = vmatpush1.xpose.msra.mxu0 %v1096
    %1199 = vmatprep.subr.mxu0 0.0
    %1200 = vmatpush1.xpose.msra.mxu0 %v1098
    %1201 = vmatprep.subr.mxu0 0.0
    %1202 = vmatpush1.xpose.msra.mxu0 %v1100
    %1203 = vmatprep.subr.mxu0 0.0
    %1204 = vmatpush1.xpose.msra.mxu0 %v1102
    %1205 = vmatprep.subr.mxu0 0.0
    %1206 = vmatpush1.xpose.msra.mxu0 %v1104
    %1207 = vmatprep.subr.mxu0 0.0
    %1208 = vmatpush1.xpose.msra.mxu0 %v1106
    %1209 = vmatprep.subr.mxu0 0.0
    %1210 = vmatpush1.xpose.msra.mxu0 %v1108
    %1211 = vmatprep.subr.mxu0 0.0
    %1212 = vmatpush1.xpose.msra.mxu0 %v1110
    %1213 = vmatprep.subr.mxu0 0.0
    %1214 = vmatpush1.xpose.msra.mxu0 %v1112
    %1215 = vmatprep.subr.mxu0 0.0
    %1216 = vmatpush1.xpose.msra.mxu0 %v1114
    %1217 = vmatprep.subr.mxu0 0.0
    %1218 = vmatpush1.xpose.msra.mxu0 %v1116
    %1219 = vmatprep.subr.mxu0 0.0
    %1220 = vmatpush1.xpose.msra.mxu0 %v1118
    %1221 = vmatprep.subr.mxu0 0.0
    %1222 = vmatpush1.xpose.msra.mxu0 %v1120
    %1223 = vmatprep.subr.mxu0 0.0
    %1224 = vmatpush1.xpose.msra.mxu0 0.0
    %1225 = vmatprep.subr.mxu0 0.0
    %1226 = vmatpush1.xpose.msra.mxu0 0.0
    %1227 = vmatprep.subr.mxu0 0.0
    %1228 = vmatpush1.xpose.msra.mxu0 0.0
    %1229 = vmatprep.subr.mxu0 0.0
    %1230 = vmatpush1.xpose.msra.mxu0 0.0
    %1231 = vmatprep.subr.mxu0 0.0
    %1232 = vmatpush1.xpose.msra.mxu0 0.0
    %1233 = vmatprep.subr.mxu0 0.0
    %1234 = vmatpush1.xpose.msra.mxu0 0.0
    %1235 = vmatprep.subr.mxu0 0.0
    %1236 = vmatpush1.xpose.msra.mxu0 0.0
    %1237 = vmatprep.subr.mxu0 0.0
    %1238 = vmatpush1.xpose.msra.mxu0 0.0
    %1239 = vmatprep.subr.mxu0 0.0
    %1240 = vmatpush1.xpose.msra.mxu0 0.0
    %1241 = vmatprep.subr.mxu0 0.0
    %1242 = vmatpush1.xpose.msra.mxu0 0.0
    %1243 = vmatprep.subr.mxu0 0.0
    %1244 = vmatpush1.xpose.msra.mxu0 0.0
    %1245 = vmatprep.subr.mxu0 0.0
    %1246 = vmatpush1.xpose.msra.mxu0 0.0
    %1247 = vmatprep.subr.mxu0 0.0
    %1248 = vmatpush1.xpose.msra.mxu0 0.0
    %1249 = vmatprep.subr.mxu0 0.0
    %1250 = vmatpush1.xpose.msra.mxu0 0.0
    %1251 = vmatprep.subr.mxu0 0.0
    %1252 = vmatpush1.xpose.msra.mxu0 0.0
    %1253 = vmatprep.subr.mxu0 0.0
    %1254 = vmatpush1.xpose.msra.mxu0 0.0
    %1255 = vmatprep.mubr.f32.mxu0 0.0
    %1256 = vmatmul.mubr.f32.gmra.mrb[0].mxu0 1.0
    %v1257 = vpop.f32.mrb[0].mxu0
    %v1258 = vadd.f32 0.0, %v1257
    %v1259 = vpop.f32.mrb[0].mxu0
    %1260 = vdwg.mxu0
    %v1261 = vrcp.pop %v1258
    %v1262 = vlaneseq
    %v1263 = vshrl.u32 %v1262, 7
    %v1264 = vsub.s32 0, %v1263
    %v1265 = vrot.slane %v1261, %v1264
    %v1266 = vmul.f32 %v1188, %v1265
    %1267 = vmatprep.subr.mxu0 0.0
    %1268 = vmatpush1.msra.mxu0 %v1266
    %1269 = vmatprep.subr.mxu0 0.0
    %1270 = vmatpush1.msra.mxu0 0.0
    %1271 = vmatprep.subr.mxu0 0.0
    %1272 = vmatpush1.msra.mxu0 0.0
    %1273 = vmatprep.subr.mxu0 0.0
    %1274 = vmatpush1.msra.mxu0 0.0
    %1275 = vmatprep.subr.mxu0 0.0
    %1276 = vmatpush1.msra.mxu0 0.0
    %1277 = vmatprep.subr.mxu0 0.0
    %1278 = vmatpush1.msra.mxu0 0.0
    %1279 = vmatprep.subr.mxu0 0.0
    %1280 = vmatpush1.msra.mxu0 0.0
    %1281 = vmatprep.subr.mxu0 0.0
    %1282 = vmatpush1.msra.mxu0 0.0
    %1283 = vmatprep.subr.mxu0 0.0
    %1284 = vmatpush1.msra.mxu0 0.0
    %1285 = vmatprep.subr.mxu0 0.0
    %1286 = vmatpush1.msra.mxu0 0.0
    %1287 = vmatprep.subr.mxu0 0.0
    %1288 = vmatpush1.msra.mxu0 0.0
    %1289 = vmatprep.subr.mxu0 0.0
    %1290 = vmatpush1.msra.mxu0 0.0
    %1291 = vmatprep.subr.mxu0 0.0
    %1292 = vmatpush1.msra.mxu0 0.0
    %1293 = vmatprep.subr.mxu0 0.0
    %1294 = vmatpush1.msra.mxu0 0.0
    %1295 = vmatprep.subr.mxu0 0.0
    %1296 = vmatpush1.msra.mxu0 0.0
    %1297 = vmatprep.subr.mxu0 0.0
    %1298 = vmatpush1.msra.mxu0 0.0
    %1299 = vmatprep.subr.mxu0 0.0
    %1300 = vmatpush1.msra.mxu0 0.0
    %1301 = vmatprep.subr.mxu0 0.0
    %1302 = vmatpush1.msra.mxu0 0.0
    %1303 = vmatprep.subr.mxu0 0.0
    %1304 = vmatpush1.msra.mxu0 0.0
    %1305 = vmatprep.subr.mxu0 0.0
    %1306 = vmatpush1.msra.mxu0 0.0
    %1307 = vmatprep.subr.mxu0 0.0
    %1308 = vmatpush1.msra.mxu0 0.0
    %1309 = vmatprep.subr.mxu0 0.0
    %1310 = vmatpush1.msra.mxu0 0.0
    %1311 = vmatprep.subr.mxu0 0.0
    %1312 = vmatpush1.msra.mxu0 0.0
    %1313 = vmatprep.subr.mxu0 0.0
    %1314 = vmatpush1.msra.mxu0 0.0
    %1315 = vmatprep.subr.mxu0 0.0
    %1316 = vmatpush1.msra.mxu0 0.0
    %1317 = vmatprep.subr.mxu0 0.0
    %1318 = vmatpush1.msra.mxu0 0.0
    %1319 = vmatprep.subr.mxu0 0.0
    %1320 = vmatpush1.msra.mxu0 0.0
    %1321 = vmatprep.subr.mxu0 0.0
    %1322 = vmatpush1.msra.mxu0 0.0
    %1323 = vmatprep.subr.mxu0 0.0
    %1324 = vmatpush1.msra.mxu0 0.0
    %1325 = vmatprep.subr.mxu0 0.0
    %1326 = vmatpush1.msra.mxu0 0.0
    %1327 = vmatprep.subr.mxu0 0.0
    %1328 = vmatpush1.msra.mxu0 0.0
    %1329 = vmatprep.subr.mxu0 0.0
    %1330 = vmatpush1.msra.mxu0 0.0
    %1331 = vmatprep.mubr.f32.mxu0 0.0
    %1332 = vmatmul.mubr.f32.gmra.mrb[0].mxu0 %v622
    %v1333 = vpop.f32.mrb[0].mxu0
    %v1334 = vadd.f32 %v604, %v1333
    %v1335 = vpop.f32.mrb[0].mxu0
    %1336 = vmatprep.mubr.f32.mxu0 0.0
    %1337 = vmatmul.mubr.f32.gmra.mrb[0].mxu0 %v625
    %v1338 = vpop.f32.mrb[0].mxu0
    %v1339 = vadd.f32 %v609, %v1338
    %v1340 = vpop.f32.mrb[0].mxu0
    %1341 = vmatprep.mubr.f32.mxu0 0.0
    %1342 = vmatmul.mubr.f32.gmra.mrb[0].mxu0 %v628
    %v1343 = vpop.f32.mrb[0].mxu0
    %v1344 = vadd.f32 %v614, %v1343
    %v1345 = vpop.f32.mrb[0].mxu0
    %1346 = vmatprep.mubr.f32.mxu0 0.0
    %1347 = vmatmul.mubr.f32.gmra.mrb[0].mxu0 %v631
    %v1348 = vpop.f32.mrb[0].mxu0
    %v1349 = vadd.f32 %v619, %v1348
    %v1350 = vpop.f32.mrb[0].mxu0
    %1351 = vdwg.mxu0
    %v1352 = vmul.f32 %v718, %v1334
    %v1353 = vmul.f32 %v718, %v1339
    %v1354 = vmul.f32 %v718, %v1344
    %v1355 = vmul.f32 %v718, %v1349
    %v1356 = vadd.f32 %v1352, %v732
    %v1357 = vadd.f32 %v1353, %v733
    %v1358 = vadd.f32 %v1354, %v734
    %v1359 = vadd.f32 %v1355, %v735
    %s1360 = scalar_lea.vmem [#allocation3], 32
    %1361 = vst [vmem:[%s1360] sm:$0xff] %v1356
    %1362 = vst [vmem:[%s1360 + $0x8] sm:$0xff] %v1357
    %1363 = vst [vmem:[%s1360 + $0x10] sm:$0xff] %v1358
    %1364 = vst [vmem:[%s1360 + $0x18] sm:$0xff] %v1359
    // Predicated region
    $region26: #{tpu_custom_call.1} parent=1 // pred_check
      _
    $region27: #{tpu_custom_call.1} parent=1 // pred_check_branch
      %1366 = sbr.rel (0) target = $region29
    $region28: #{tpu_custom_call.1} parent=1 // pred_region
      %s1368 = ssub.s32 1024, 1024
      %1369 = vsyncadd [#allocation4], %s1368
      %s1370 = sshll.u32 [#allocation3], 4
      %s1371 = int_to_ptr.vmem [resolvable:$true] %s1370
      %1376 = dma.vmem_to_hbm [thread:$0]  %s1371, 1024, %s6, [#allocation4], 128, 128, 8
    $region29: #{tpu_custom_call.1} parent=1 // pred_fallthru
      _
    // Predicated region
    $region30: #{tpu_custom_call.1} parent=1 // pred_check
      _
    $region31: #{tpu_custom_call.1} parent=1 // pred_check_branch
      %1378 = sbr.rel (0) target = $region33
    $region32: #{tpu_custom_call.1} parent=1 // pred_region
      %1379 = dma.done [#allocation4], 1024
    $region33: #{tpu_custom_call.1} parent=1 // pred_fallthru
      _
    %1380 = vsyncpa [#allocation4], 1

</llo_original>
